<compile_context>
chip_gen: v5e
topology: v5e:2x2
jax: 0.10.0
libtpu: 0.0.40
codegen_flags: <defaults>
</compile_context>

<pallas_src>
import functools
import math

import jax
import jax.numpy as jnp
from jax.experimental import pallas as pl
from jax.experimental.pallas import tpu as pltpu

VMEM = pltpu.MemorySpace.VMEM

# ---- network hyper-parameters (mirrors Network.__init__ arguments) ----------
MAX_RADIUS = 2.0
NUM_BASIS = 10            # number_of_basis
LMAX = 1
SH_DIM = (LMAX + 1) ** 2  # 4  (irreps_edge_attr = SH up to lmax)
RADIAL_NEURONS = 16       # radial_neurons (kept small for the synthetic run)
F_IN = 4                  # irreps_in  ~ "4x0e"
N_SCALARS = 16            # gate scalars per hidden layer   (mul)
N_GATES = 16              # gate "gates" per hidden layer   (mul)
N_GATED = 16              # gated features per hidden layer (mul)
F_HID = N_SCALARS + N_GATED               # gate.irreps_out dim = 32
CONV_MID = N_SCALARS + N_GATES + N_GATED  # gate.irreps_in dim = 48
F_OUT = 4                 # irreps_out ~ "4x0e"
N_LAYERS = 2              # gated layers; +1 final convolution
LANE = 128                # lane-dense feature padding


# ----------------------------- fused Pallas kernel ---------------------------
def network_kernel(x_ref, z_ref, evec_ref, esrc_ref, edst_ref, bmat_ref,
                   wsc_ref, wlin1_ref, wr1_ref, wr2_ref, wlin2_ref, out_ref,
                   *, n_total_layers, sh_dim, lane, n_scalars, n_gates,
                   inv_sqrt_nn):
    f32 = jnp.float32
    bf16 = jnp.bfloat16
    n_pad = x_ref.shape[0]
    e_pad = evec_ref.shape[0]

    # -------- edge geometry (computed once, reused by every layer) ----------
    v = evec_ref[...]                                   # (E, 3)
    ex, ey, ez = v[:, 0:1], v[:, 1:2], v[:, 2:3]
    r2 = ex * ex + ey * ey + ez * ez
    inv_r = jax.lax.rsqrt(r2 + 1e-12)                   # no div, no r==0 NaN
    r = r2 * inv_r                                      # (E, 1)

    # spherical harmonics, normalize=True, normalization='component'
    # (l=1 stored in (y, z, x) order, as in the original synthetic version)
    s3 = math.sqrt(3.0)
    sh = (jnp.ones_like(r), s3 * ey * inv_r, s3 * ez * inv_r, s3 * ex * inv_r)

    # smooth_cutoff(edge_length / max_radius)
    u = 2.0 * (r * (1.0 / MAX_RADIUS) - 1.0)
    cut = (1.0 - jnp.cos(jnp.pi * u)) * 0.5
    cut = jnp.where(u > 0.0, 0.0, cut)
    cut = jnp.where(u < -1.0, 1.0, cut)

    # edge_attr broadcast once to a lane-dense (E, sh_dim*lane) slab so the
    # per-layer tensor product is pure lane-aligned VPU work (no width-1
    # slices / broadcasts inside the layer loop).
    eattr_b = jnp.concatenate(
        [jnp.broadcast_to(cut * c, (e_pad, lane)) for c in sh], axis=1)

    # gaussian radial basis * sqrt(number_of_basis); lanes >= NUM_BASIS hit
    # zero rows of w_r1, so computing all 128 lanes is harmless & lane-dense.
    step = MAX_RADIUS / (NUM_BASIS - 1)
    centers = jax.lax.broadcasted_iota(jnp.int32, (1, lane), 1).astype(f32) * step
    diff = (r - centers) * (1.0 / step)
    eemb_bf = (jnp.exp(-(diff * diff)) *
               (math.sqrt(float(NUM_BASIS)) / 1.12)).astype(bf16)

    # -------- gather / scatter one-hots built in-kernel (bf16, VMEM) --------
    # TODO(synk): at large E*N replace with edge-tiled scatter-accumulate +
    # scalar-prefetched indices; here the bf16 one-hots live only in VMEM.
    src = esrc_ref[...]                                  # (E, 1) int32
    dst = edst_ref[...]                                  # (1, E) int32
    gat = (jax.lax.broadcasted_iota(jnp.int32, (e_pad, n_pad), 1)
           == src).astype(bf16)                          # (E, N)
    sca = (jax.lax.broadcasted_iota(jnp.int32, (n_pad, e_pad), 0)
           == dst).astype(bf16)                          # (N, E)

    zb = jnp.broadcast_to(z_ref[...], (n_pad, lane))     # hoisted broadcast

    # ------------------------------ layers ----------------------------------
    h = x_ref[...]                                       # (N, lane) f32
    for l in range(n_total_layers):
        apply_gate = l < n_total_layers - 1
        h_bf = h.astype(bf16)
        wsc = wsc_ref[l]
        wl1 = wlin1_ref[l]
        wr1 = wr1_ref[l]
        wr2 = wr2_ref[l]
        wl2 = wlin2_ref[l]

        # self-connection (FullyConnectedTensorProduct with scalar node attr)
        sc = jnp.dot(h_bf, wsc, preferred_element_type=f32) * zb
        # first linear
        x1 = jnp.dot(h_bf, wl1, preferred_element_type=f32)
        # gather node features to edges: x1[edge_src]
        xg = jnp.dot(gat, x1.astype(bf16), preferred_element_type=f32)

        # radial MLP (bias-free FullyConnectedNet, 1 hidden layer, silu)
        rh = jnp.dot(eemb_bf, wr1, preferred_element_type=f32)
        rh = rh * jax.nn.sigmoid(rh)                     # silu (f32 VPU)
        w = jnp.dot(rh.astype(bf16), wr2, preferred_element_type=f32)  # (E, sh*lane)

        # flattened "uvu" tensor product with the (pre-broadcast) edge_attr
        tp = eattr_b * w
        ww = tp[:, 0:lane]
        for s in range(1, sh_dim):                       # lane-aligned slices
            ww = ww + tp[:, s * lane:(s + 1) * lane]
        msg = xg * ww

        # scatter-sum to edge_dst, normalize by sqrt(num_neighbors)
        agg = jnp.dot(sca, msg.astype(bf16), preferred_element_type=f32)
        agg = agg * inv_sqrt_nn
        out = sc + jnp.dot(agg.astype(bf16), wl2, preferred_element_type=f32)

        if apply_gate:
            # Gate without concatenate: lane-index masks + one XLU roll.
            # layout of `out`: [scalars 0:16 | gates 16:32 | gated 32:48 | 0s]
            col = jax.lax.broadcasted_iota(jnp.int32, out.shape, 1)
            sig = jax.nn.sigmoid(out)
            # bring gated block (cols 32:48) to cols 16:32, gate it there
            gated = pltpu.roll(out, shift=lane - n_gates, axis=1) * sig
            h = jnp.where(col < n_scalars, out * sig,            # silu scalars
                          jnp.where(col < n_scalars + n_gates, gated, 0.0))
        else:
            h = out

    # reduce_output=True -> scatter_mean over batch (fused into final store)
    out_ref[...] = jnp.dot(bmat_ref[...], h, preferred_element_type=f32)


# --------------------------- parameter construction ---------------------------
def _pad2(a, shape):
    return jnp.zeros(shape, a.dtype).at[:a.shape[0], :a.shape[1]].set(a)


def init_network_params(key):
    dims = []
    f = F_IN
    for _ in range(N_LAYERS):            # CustomCompose(Convolution, Gate)
        dims.append((f, CONV_MID))
        f = F_HID
    dims.append((f, F_OUT))              # final Convolution

    keys = jax.random.split(key, len(dims))
    wsc, wl1, wr1, wr2, wl2 = [], [], [], [], []

    def lin(k, fi, fo):
        return jax.random.normal(k, (fi, fo), jnp.float32) / math.sqrt(fi)

    for k, (fi, fo) in zip(keys, dims):
        k0, k1, k2, k3, k4 = jax.random.split(k, 5)
        wsc.append(_pad2(lin(k0, fi, fo), (LANE, LANE)))
        wl1.append(_pad2(lin(k1, fi, fi), (LANE, LANE)))
        wr1.append(_pad2(lin(k2, NUM_BASIS, RADIAL_NEURONS), (LANE, LANE)))
        # w_r2 is block-padded so that slice s of the per-edge weights aligns
        # with the first `fi` lanes of the 128-wide feature layout.
        w2 = lin(k3, RADIAL_NEURONS, SH_DIM * fi)
        w2p = jnp.zeros((LANE, SH_DIM * LANE), jnp.float32)
        for s in range(SH_DIM):
            w2p = w2p.at[:RADIAL_NEURONS, s * LANE:s * LANE + fi].set(
                w2[:, s * fi:(s + 1) * fi])
        wr2.append(w2p)
        wl2.append(_pad2(lin(k4, fi, fo), (LANE, LANE)))

    tobf = lambda lst: jnp.stack(lst).astype(jnp.bfloat16)
    return {"w_sc": tobf(wsc), "w_lin1": tobf(wl1), "w_r1": tobf(wr1),
            "w_r2": tobf(wr2), "w_lin2": tobf(wl2)}


# ------------------------------- forward pass ---------------------------------
def _round_up(v, m):
    return ((v + m - 1) // m) * m


def network_forward(params, x, z, edge_vec, edge_src, edge_dst, batch,
                    num_neighbors, num_graphs=1):
    n, f_in = x.shape
    e = edge_vec.shape[0]
    n_pad = _round_up(n, 8)
    e_pad = _round_up(e, 8)
    g_pad = _round_up(num_graphs, 8)

    # lane-dense / sublane-aligned padding (padded edges get length > cutoff
    # so their contribution is exactly zero; padded nodes are all-zero).
    x_p = jnp.zeros((n_pad, LANE), jnp.float32).at[:n, :f_in].set(x)
    z_p = jnp.zeros((n_pad, 1), jnp.float32).at[:n].set(z)
    ev_p = jnp.full((e_pad, 3), 2.0 * MAX_RADIUS, jnp.float32).at[:e].set(edge_vec)
    src_p = jnp.zeros((e_pad, 1), jnp.int32).at[:e, 0].set(edge_src)
    dst_p = jnp.zeros((1, e_pad), jnp.int32).at[0, :e].set(edge_dst)

    # per-graph mean matrix (tiny: G x N), folded into the kernel's final store
    counts = jnp.zeros((num_graphs,), jnp.float32).at[batch].add(1.0)
    bmat = jax.nn.one_hot(batch, num_graphs, dtype=jnp.float32).T / counts[:, None]
    bmat_p = jnp.zeros((g_pad, n_pad), jnp.float32).at[:num_graphs, :n].set(bmat)

    kern = functools.partial(
        network_kernel,
        n_total_layers=N_LAYERS + 1, sh_dim=SH_DIM, lane=LANE,
        n_scalars=N_SCALARS, n_gates=N_GATES,
        inv_sqrt_nn=1.0 / math.sqrt(num_neighbors))

    args = (x_p, z_p, ev_p, src_p, dst_p, bmat_p,
            params["w_sc"], params["w_lin1"], params["w_r1"],
            params["w_r2"], params["w_lin2"])

    out = pl.pallas_call(
        kern,
        out_shape=jax.ShapeDtypeStruct((g_pad, LANE), jnp.float32),
        in_specs=[pl.BlockSpec(memory_space=VMEM) for _ in args],
        out_specs=pl.BlockSpec(memory_space=VMEM),
        compiler_params=pltpu.CompilerParams(vmem_limit_bytes=32 * 1024 * 1024),
    )(*args)

    return out[:num_graphs, :F_OUT]


# ----------------------------------- main --------------------------------------
if __name__ == "__main__":
    key = jax.random.PRNGKey(0)
    k_x, k_vec, k_src, k_dst, k_par = jax.random.split(key, 5)

    N_NODES, N_EDGES = 8, 16
    num_neighbors = float(N_EDGES) / float(N_NODES)

    x = jax.random.normal(k_x, (N_NODES, F_IN), jnp.float32)       # data.x
    z = jnp.ones((N_NODES, 1), jnp.float32)                        # data.z ('0e')
    edge_vec = 0.7 * jax.random.normal(k_vec, (N_EDGES, 3), jnp.float32)
    edge_src = jax.random.randint(k_src, (N_EDGES,), 0, N_NODES)   # edge_index[0]
    edge_dst = jax.random.randint(k_dst, (N_EDGES,), 0, N_NODES)   # edge_index[1]
    batch = jnp.zeros((N_NODES,), jnp.int32)                       # single graph

    params = init_network_params(k_par)

    out = network_forward(params, x, z, edge_vec, edge_src, edge_dst, batch,
                          num_neighbors)
    out = jax.block_until_ready(out)
    assert out.shape == (1, F_OUT)
    assert bool(jnp.all(jnp.isfinite(out)))
    print("KERNEL_OK")
</pallas_src>

<mosaic_0001>
module attributes {stable_mosaic.version = 11 : i64} {
  func.func @network_kernel(%arg0: memref<8x128xf32, #tpu.memory_space<vmem>>, %arg1: memref<8x1xf32, #tpu.memory_space<vmem>>, %arg2: memref<16x3xf32, #tpu.memory_space<vmem>>, %arg3: memref<16x1xi32, #tpu.memory_space<vmem>>, %arg4: memref<1x16xi32, #tpu.memory_space<vmem>>, %arg5: memref<8x8xf32, #tpu.memory_space<vmem>>, %arg6: memref<3x128x128xbf16, #tpu.memory_space<vmem>>, %arg7: memref<3x128x128xbf16, #tpu.memory_space<vmem>>, %arg8: memref<3x128x128xbf16, #tpu.memory_space<vmem>>, %arg9: memref<3x128x512xbf16, #tpu.memory_space<vmem>>, %arg10: memref<3x128x128xbf16, #tpu.memory_space<vmem>>, %arg11: memref<8x128xf32, #tpu.memory_space<vmem>>) attributes {dimension_semantics = [], scalar_prefetch = 0 : i64, scratch_operands = 0 : i64, tpu.core_type = #tpu.core_type<tc>} {
    %c0 = arith.constant 0 : index
    %c0_0 = arith.constant 0 : index
    %0 = vector.load %arg2[%c0, %c0_0] : memref<16x3xf32, #tpu.memory_space<vmem>>, vector<16x3xf32>
    %1 = vector.extract_strided_slice %0 {offsets = [0, 0], sizes = [16, 1], strides = [1, 1]} : vector<16x3xf32> to vector<16x1xf32>
    %2 = vector.extract_strided_slice %0 {offsets = [0, 1], sizes = [16, 1], strides = [1, 1]} : vector<16x3xf32> to vector<16x1xf32>
    %3 = vector.extract_strided_slice %0 {offsets = [0, 2], sizes = [16, 1], strides = [1, 1]} : vector<16x3xf32> to vector<16x1xf32>
    %4 = arith.mulf %1, %1 : vector<16x1xf32>
    %5 = arith.mulf %2, %2 : vector<16x1xf32>
    %6 = arith.addf %4, %5 : vector<16x1xf32>
    %7 = arith.mulf %3, %3 : vector<16x1xf32>
    %8 = arith.addf %6, %7 : vector<16x1xf32>
    %cst = arith.constant 9.99999996E-13 : f32
    %9 = vector.broadcast %cst : f32 to vector<16x1xf32>
    %10 = arith.addf %8, %9 : vector<16x1xf32>
    %11 = math.rsqrt %10 : vector<16x1xf32>
    %12 = arith.mulf %8, %11 : vector<16x1xf32>
    %cst_1 = arith.constant 1.000000e+00 : f32
    %13 = vector.broadcast %cst_1 : f32 to vector<16x1xf32>
    %cst_2 = arith.constant 1.73205078 : f32
    %14 = vector.broadcast %cst_2 : f32 to vector<16x1xf32>
    %15 = arith.mulf %14, %2 : vector<16x1xf32>
    %16 = arith.mulf %15, %11 : vector<16x1xf32>
    %cst_3 = arith.constant 1.73205078 : f32
    %17 = vector.broadcast %cst_3 : f32 to vector<16x1xf32>
    %18 = arith.mulf %17, %3 : vector<16x1xf32>
    %19 = arith.mulf %18, %11 : vector<16x1xf32>
    %cst_4 = arith.constant 1.73205078 : f32
    %20 = vector.broadcast %cst_4 : f32 to vector<16x1xf32>
    %21 = arith.mulf %20, %1 : vector<16x1xf32>
    %22 = arith.mulf %21, %11 : vector<16x1xf32>
    %cst_5 = arith.constant 5.000000e-01 : f32
    %23 = vector.broadcast %cst_5 : f32 to vector<16x1xf32>
    %24 = arith.mulf %12, %23 : vector<16x1xf32>
    %cst_6 = arith.constant 1.000000e+00 : f32
    %25 = vector.broadcast %cst_6 : f32 to vector<16x1xf32>
    %26 = arith.subf %24, %25 : vector<16x1xf32>
    %cst_7 = arith.constant 2.000000e+00 : f32
    %27 = vector.broadcast %cst_7 : f32 to vector<16x1xf32>
    %28 = arith.mulf %27, %26 : vector<16x1xf32>
    %cst_8 = arith.constant 3.14159274 : f32
    %29 = vector.broadcast %cst_8 : f32 to vector<16x1xf32>
    %30 = arith.mulf %29, %28 : vector<16x1xf32>
    %31 = math.cos %30 : vector<16x1xf32>
    %cst_9 = arith.constant 1.000000e+00 : f32
    %32 = vector.broadcast %cst_9 : f32 to vector<16x1xf32>
    %33 = arith.subf %32, %31 : vector<16x1xf32>
    %cst_10 = arith.constant 5.000000e-01 : f32
    %34 = vector.broadcast %cst_10 : f32 to vector<16x1xf32>
    %35 = arith.mulf %33, %34 : vector<16x1xf32>
    %cst_11 = arith.constant 0.000000e+00 : f32
    %36 = vector.broadcast %cst_11 : f32 to vector<16x1xf32>
    %37 = arith.cmpf ogt, %28, %36 : vector<16x1xf32>
    %cst_12 = arith.constant 0.000000e+00 : f32
    %38 = vector.broadcast %cst_12 : f32 to vector<16x1xf32>
    %39 = arith.select %37, %38, %35 : vector<16x1xi1>, vector<16x1xf32>
    %cst_13 = arith.constant -1.000000e+00 : f32
    %40 = vector.broadcast %cst_13 : f32 to vector<16x1xf32>
    %41 = arith.cmpf olt, %28, %40 : vector<16x1xf32>
    %cst_14 = arith.constant 1.000000e+00 : f32
    %42 = vector.broadcast %cst_14 : f32 to vector<16x1xf32>
    %43 = arith.select %41, %42, %39 : vector<16x1xi1>, vector<16x1xf32>
    %44 = arith.mulf %43, %13 : vector<16x1xf32>
    %45 = vector.shape_cast %44 : vector<16x1xf32> to vector<16x1xf32>
    %46 = vector.broadcast %45 : vector<16x1xf32> to vector<16x128xf32>
    %47 = arith.mulf %43, %16 : vector<16x1xf32>
    %48 = vector.shape_cast %47 : vector<16x1xf32> to vector<16x1xf32>
    %49 = vector.broadcast %48 : vector<16x1xf32> to vector<16x128xf32>
    %50 = arith.mulf %43, %19 : vector<16x1xf32>
    %51 = vector.shape_cast %50 : vector<16x1xf32> to vector<16x1xf32>
    %52 = vector.broadcast %51 : vector<16x1xf32> to vector<16x128xf32>
    %53 = arith.mulf %43, %22 : vector<16x1xf32>
    %54 = vector.shape_cast %53 : vector<16x1xf32> to vector<16x1xf32>
    %55 = vector.broadcast %54 : vector<16x1xf32> to vector<16x128xf32>
    %56 = tpu.concatenate %46, %49, %52, %55 in 1 : vector<16x128xf32>, vector<16x128xf32>, vector<16x128xf32>, vector<16x128xf32> -> vector<16x512xf32>
    %57 = tpu.iota {dimensions = array<i32: 1>} : vector<1x128xi32>
    %58 = arith.sitofp %57 : vector<1x128xi32> to vector<1x128xf32>
    %cst_15 = arith.constant 0.222222224 : f32
    %59 = vector.broadcast %cst_15 : f32 to vector<1x128xf32>
    %60 = arith.mulf %58, %59 : vector<1x128xf32>
    %61 = vector.broadcast %12 : vector<16x1xf32> to vector<16x128xf32>
    %62 = vector.broadcast %60 : vector<1x128xf32> to vector<16x128xf32>
    %63 = arith.subf %61, %62 : vector<16x128xf32>
    %cst_16 = arith.constant 4.500000e+00 : f32
    %64 = vector.broadcast %cst_16 : f32 to vector<16x128xf32>
    %65 = arith.mulf %63, %64 : vector<16x128xf32>
    %66 = arith.mulf %65, %65 : vector<16x128xf32>
    %cst_17 = arith.constant 0.000000e+00 : f32
    %67 = vector.broadcast %cst_17 : f32 to vector<16x128xf32>
    %68 = arith.subf %67, %66 : vector<16x128xf32>
    %69 = math.exp %68 : vector<16x128xf32>
    %cst_18 = arith.constant 2.82346225 : f32
    %70 = vector.broadcast %cst_18 : f32 to vector<16x128xf32>
    %71 = arith.mulf %69, %70 : vector<16x128xf32>
    %72 = arith.truncf %71 : vector<16x128xf32> to vector<16x128xbf16>
    %c0_19 = arith.constant 0 : index
    %c0_20 = arith.constant 0 : index
    %73 = vector.load %arg3[%c0_19, %c0_20] : memref<16x1xi32, #tpu.memory_space<vmem>>, vector<16x1xi32>
    %c0_21 = arith.constant 0 : index
    %c0_22 = arith.constant 0 : index
    %74 = vector.load %arg4[%c0_21, %c0_22] : memref<1x16xi32, #tpu.memory_space<vmem>>, vector<1x16xi32>
    %75 = tpu.iota {dimensions = array<i32: 1>} : vector<16x8xi32>
    %76 = vector.broadcast %73 : vector<16x1xi32> to vector<16x8xi32>
    %77 = arith.cmpi eq, %75, %76 : vector<16x8xi32>
    %78 = arith.extui %77 : vector<16x8xi1> to vector<16x8xi32>
    %79 = arith.sitofp %78 : vector<16x8xi32> to vector<16x8xf32>
    %80 = arith.truncf %79 : vector<16x8xf32> to vector<16x8xbf16>
    %81 = tpu.iota {dimensions = array<i32: 0>} : vector<8x16xi32>
    %82 = vector.broadcast %74 : vector<1x16xi32> to vector<8x16xi32>
    %83 = arith.cmpi eq, %81, %82 : vector<8x16xi32>
    %84 = arith.extui %83 : vector<8x16xi1> to vector<8x16xi32>
    %85 = arith.sitofp %84 : vector<8x16xi32> to vector<8x16xf32>
    %86 = arith.truncf %85 : vector<8x16xf32> to vector<8x16xbf16>
    %c0_23 = arith.constant 0 : index
    %c0_24 = arith.constant 0 : index
    %87 = vector.load %arg1[%c0_23, %c0_24] : memref<8x1xf32, #tpu.memory_space<vmem>>, vector<8x1xf32>
    %88 = vector.shape_cast %87 : vector<8x1xf32> to vector<8x1xf32>
    %89 = vector.broadcast %88 : vector<8x1xf32> to vector<8x128xf32>
    %c0_25 = arith.constant 0 : index
    %c0_26 = arith.constant 0 : index
    %90 = vector.load %arg0[%c0_25, %c0_26] : memref<8x128xf32, #tpu.memory_space<vmem>>, vector<8x128xf32>
    %91 = arith.truncf %90 : vector<8x128xf32> to vector<8x128xbf16>
    %c0_27 = arith.constant 0 : index
    %c0_28 = arith.constant 0 : index
    %c0_29 = arith.constant 0 : index
    %92 = vector.load %arg6[%c0_27, %c0_28, %c0_29] : memref<3x128x128xbf16, #tpu.memory_space<vmem>>, vector<1x128x128xbf16>
    %93 = vector.shape_cast %92 : vector<1x128x128xbf16> to vector<128x128xbf16>
    %c0_30 = arith.constant 0 : index
    %c0_31 = arith.constant 0 : index
    %c0_32 = arith.constant 0 : index
    %94 = vector.load %arg7[%c0_30, %c0_31, %c0_32] : memref<3x128x128xbf16, #tpu.memory_space<vmem>>, vector<1x128x128xbf16>
    %95 = vector.shape_cast %94 : vector<1x128x128xbf16> to vector<128x128xbf16>
    %c0_33 = arith.constant 0 : index
    %c0_34 = arith.constant 0 : index
    %c0_35 = arith.constant 0 : index
    %96 = vector.load %arg8[%c0_33, %c0_34, %c0_35] : memref<3x128x128xbf16, #tpu.memory_space<vmem>>, vector<1x128x128xbf16>
    %97 = vector.shape_cast %96 : vector<1x128x128xbf16> to vector<128x128xbf16>
    %c0_36 = arith.constant 0 : index
    %c0_37 = arith.constant 0 : index
    %c0_38 = arith.constant 0 : index
    %98 = vector.load %arg9[%c0_36, %c0_37, %c0_38] : memref<3x128x512xbf16, #tpu.memory_space<vmem>>, vector<1x128x512xbf16>
    %99 = vector.shape_cast %98 : vector<1x128x512xbf16> to vector<128x512xbf16>
    %c0_39 = arith.constant 0 : index
    %c0_40 = arith.constant 0 : index
    %c0_41 = arith.constant 0 : index
    %100 = vector.load %arg10[%c0_39, %c0_40, %c0_41] : memref<3x128x128xbf16, #tpu.memory_space<vmem>>, vector<1x128x128xbf16>
    %101 = vector.shape_cast %100 : vector<1x128x128xbf16> to vector<128x128xbf16>
    %cst_42 = arith.constant dense<0.000000e+00> : vector<8x128xf32>
    %102 = tpu.matmul %91, %93, %cst_42 {dimension_numbers = #tpu.dot_dimension_numbers<[1], [0], [0], [1], [0, 0, 1, 1], [], []>} : vector<8x128xbf16>, vector<128x128xbf16>, vector<8x128xf32> -> vector<8x128xf32>
    %103 = arith.mulf %102, %89 : vector<8x128xf32>
    %cst_43 = arith.constant dense<0.000000e+00> : vector<8x128xf32>
    %104 = tpu.matmul %91, %95, %cst_43 {dimension_numbers = #tpu.dot_dimension_numbers<[1], [0], [0], [1], [0, 0, 1, 1], [], []>} : vector<8x128xbf16>, vector<128x128xbf16>, vector<8x128xf32> -> vector<8x128xf32>
    %105 = arith.truncf %104 : vector<8x128xf32> to vector<8x128xbf16>
    %cst_44 = arith.constant dense<0.000000e+00> : vector<16x128xf32>
    %106 = tpu.matmul %80, %105, %cst_44 {dimension_numbers = #tpu.dot_dimension_numbers<[1], [0], [0], [1], [0, 0, 1, 1], [], []>} : vector<16x8xbf16>, vector<8x128xbf16>, vector<16x128xf32> -> vector<16x128xf32>
    %cst_45 = arith.constant dense<0.000000e+00> : vector<16x128xf32>
    %107 = tpu.matmul %72, %97, %cst_45 {dimension_numbers = #tpu.dot_dimension_numbers<[1], [0], [0], [1], [0, 0, 1, 1], [], []>} : vector<16x128xbf16>, vector<128x128xbf16>, vector<16x128xf32> -> vector<16x128xf32>
    %108 = arith.negf %107 : vector<16x128xf32>
    %109 = math.exp %108 : vector<16x128xf32>
    %cst_46 = arith.constant 1.000000e+00 : f32
    %110 = vector.broadcast %cst_46 : f32 to vector<16x128xf32>
    %111 = arith.addf %110, %109 : vector<16x128xf32>
    %112 = arith.divf %110, %111 : vector<16x128xf32>
    %113 = arith.mulf %107, %112 : vector<16x128xf32>
    %114 = arith.truncf %113 : vector<16x128xf32> to vector<16x128xbf16>
    %cst_47 = arith.constant dense<0.000000e+00> : vector<16x512xf32>
    %115 = tpu.matmul %114, %99, %cst_47 {dimension_numbers = #tpu.dot_dimension_numbers<[1], [0], [0], [1], [0, 0, 1, 1], [], []>} : vector<16x128xbf16>, vector<128x512xbf16>, vector<16x512xf32> -> vector<16x512xf32>
    %116 = arith.mulf %56, %115 : vector<16x512xf32>
    %117 = vector.extract_strided_slice %116 {offsets = [0, 0], sizes = [16, 128], strides = [1, 1]} : vector<16x512xf32> to vector<16x128xf32>
    %118 = vector.extract_strided_slice %116 {offsets = [0, 128], sizes = [16, 128], strides = [1, 1]} : vector<16x512xf32> to vector<16x128xf32>
    %119 = arith.addf %117, %118 : vector<16x128xf32>
    %120 = vector.extract_strided_slice %116 {offsets = [0, 256], sizes = [16, 128], strides = [1, 1]} : vector<16x512xf32> to vector<16x128xf32>
    %121 = arith.addf %119, %120 : vector<16x128xf32>
    %122 = vector.extract_strided_slice %116 {offsets = [0, 384], sizes = [16, 128], strides = [1, 1]} : vector<16x512xf32> to vector<16x128xf32>
    %123 = arith.addf %121, %122 : vector<16x128xf32>
    %124 = arith.mulf %106, %123 : vector<16x128xf32>
    %125 = arith.truncf %124 : vector<16x128xf32> to vector<16x128xbf16>
    %cst_48 = arith.constant dense<0.000000e+00> : vector<8x128xf32>
    %126 = tpu.matmul %86, %125, %cst_48 {dimension_numbers = #tpu.dot_dimension_numbers<[1], [0], [0], [1], [0, 0, 1, 1], [], []>} : vector<8x16xbf16>, vector<16x128xbf16>, vector<8x128xf32> -> vector<8x128xf32>
    %cst_49 = arith.constant 0.707106769 : f32
    %127 = vector.broadcast %cst_49 : f32 to vector<8x128xf32>
    %128 = arith.mulf %126, %127 : vector<8x128xf32>
    %129 = arith.truncf %128 : vector<8x128xf32> to vector<8x128xbf16>
    %cst_50 = arith.constant dense<0.000000e+00> : vector<8x128xf32>
    %130 = tpu.matmul %129, %101, %cst_50 {dimension_numbers = #tpu.dot_dimension_numbers<[1], [0], [0], [1], [0, 0, 1, 1], [], []>} : vector<8x128xbf16>, vector<128x128xbf16>, vector<8x128xf32> -> vector<8x128xf32>
    %131 = arith.addf %103, %130 : vector<8x128xf32>
    %132 = tpu.iota {dimensions = array<i32: 1>} : vector<8x128xi32>
    %133 = arith.negf %131 : vector<8x128xf32>
    %134 = math.exp %133 : vector<8x128xf32>
    %cst_51 = arith.constant 1.000000e+00 : f32
    %135 = vector.broadcast %cst_51 : f32 to vector<8x128xf32>
    %136 = arith.addf %135, %134 : vector<8x128xf32>
    %137 = arith.divf %135, %136 : vector<8x128xf32>
    %c112_i32 = arith.constant 112 : i32
    %138 = tpu.dynamic_rotate %131 by %c112_i32 dim 1 : vector<8x128xf32>, i32 -> vector<8x128xf32>
    %139 = arith.mulf %138, %137 : vector<8x128xf32>
    %c16_i32 = arith.constant 16 : i32
    %140 = vector.broadcast %c16_i32 : i32 to vector<8x128xi32>
    %141 = arith.cmpi slt, %132, %140 : vector<8x128xi32>
    %142 = arith.mulf %131, %137 : vector<8x128xf32>
    %c32_i32 = arith.constant 32 : i32
    %143 = vector.broadcast %c32_i32 : i32 to vector<8x128xi32>
    %144 = arith.cmpi slt, %132, %143 : vector<8x128xi32>
    %cst_52 = arith.constant 0.000000e+00 : f32
    %145 = vector.broadcast %cst_52 : f32 to vector<8x128xf32>
    %146 = arith.select %144, %139, %145 : vector<8x128xi1>, vector<8x128xf32>
    %147 = arith.select %141, %142, %146 : vector<8x128xi1>, vector<8x128xf32>
    %148 = arith.truncf %147 : vector<8x128xf32> to vector<8x128xbf16>
    %c1 = arith.constant 1 : index
    %c0_53 = arith.constant 0 : index
    %c0_54 = arith.constant 0 : index
    %149 = vector.load %arg6[%c1, %c0_53, %c0_54] : memref<3x128x128xbf16, #tpu.memory_space<vmem>>, vector<1x128x128xbf16>
    %150 = vector.shape_cast %149 : vector<1x128x128xbf16> to vector<128x128xbf16>
    %c1_55 = arith.constant 1 : index
    %c0_56 = arith.constant 0 : index
    %c0_57 = arith.constant 0 : index
    %151 = vector.load %arg7[%c1_55, %c0_56, %c0_57] : memref<3x128x128xbf16, #tpu.memory_space<vmem>>, vector<1x128x128xbf16>
    %152 = vector.shape_cast %151 : vector<1x128x128xbf16> to vector<128x128xbf16>
    %c1_58 = arith.constant 1 : index
    %c0_59 = arith.constant 0 : index
    %c0_60 = arith.constant 0 : index
    %153 = vector.load %arg8[%c1_58, %c0_59, %c0_60] : memref<3x128x128xbf16, #tpu.memory_space<vmem>>, vector<1x128x128xbf16>
    %154 = vector.shape_cast %153 : vector<1x128x128xbf16> to vector<128x128xbf16>
    %c1_61 = arith.constant 1 : index
    %c0_62 = arith.constant 0 : index
    %c0_63 = arith.constant 0 : index
    %155 = vector.load %arg9[%c1_61, %c0_62, %c0_63] : memref<3x128x512xbf16, #tpu.memory_space<vmem>>, vector<1x128x512xbf16>
    %156 = vector.shape_cast %155 : vector<1x128x512xbf16> to vector<128x512xbf16>
    %c1_64 = arith.constant 1 : index
    %c0_65 = arith.constant 0 : index
    %c0_66 = arith.constant 0 : index
    %157 = vector.load %arg10[%c1_64, %c0_65, %c0_66] : memref<3x128x128xbf16, #tpu.memory_space<vmem>>, vector<1x128x128xbf16>
    %158 = vector.shape_cast %157 : vector<1x128x128xbf16> to vector<128x128xbf16>
    %cst_67 = arith.constant dense<0.000000e+00> : vector<8x128xf32>
    %159 = tpu.matmul %148, %150, %cst_67 {dimension_numbers = #tpu.dot_dimension_numbers<[1], [0], [0], [1], [0, 0, 1, 1], [], []>} : vector<8x128xbf16>, vector<128x128xbf16>, vector<8x128xf32> -> vector<8x128xf32>
    %160 = arith.mulf %159, %89 : vector<8x128xf32>
    %cst_68 = arith.constant dense<0.000000e+00> : vector<8x128xf32>
    %161 = tpu.matmul %148, %152, %cst_68 {dimension_numbers = #tpu.dot_dimension_numbers<[1], [0], [0], [1], [0, 0, 1, 1], [], []>} : vector<8x128xbf16>, vector<128x128xbf16>, vector<8x128xf32> -> vector<8x128xf32>
    %162 = arith.truncf %161 : vector<8x128xf32> to vector<8x128xbf16>
    %cst_69 = arith.constant dense<0.000000e+00> : vector<16x128xf32>
    %163 = tpu.matmul %80, %162, %cst_69 {dimension_numbers = #tpu.dot_dimension_numbers<[1], [0], [0], [1], [0, 0, 1, 1], [], []>} : vector<16x8xbf16>, vector<8x128xbf16>, vector<16x128xf32> -> vector<16x128xf32>
    %cst_70 = arith.constant dense<0.000000e+00> : vector<16x128xf32>
    %164 = tpu.matmul %72, %154, %cst_70 {dimension_numbers = #tpu.dot_dimension_numbers<[1], [0], [0], [1], [0, 0, 1, 1], [], []>} : vector<16x128xbf16>, vector<128x128xbf16>, vector<16x128xf32> -> vector<16x128xf32>
    %165 = arith.negf %164 : vector<16x128xf32>
    %166 = math.exp %165 : vector<16x128xf32>
    %cst_71 = arith.constant 1.000000e+00 : f32
    %167 = vector.broadcast %cst_71 : f32 to vector<16x128xf32>
    %168 = arith.addf %167, %166 : vector<16x128xf32>
    %169 = arith.divf %167, %168 : vector<16x128xf32>
    %170 = arith.mulf %164, %169 : vector<16x128xf32>
    %171 = arith.truncf %170 : vector<16x128xf32> to vector<16x128xbf16>
    %cst_72 = arith.constant dense<0.000000e+00> : vector<16x512xf32>
    %172 = tpu.matmul %171, %156, %cst_72 {dimension_numbers = #tpu.dot_dimension_numbers<[1], [0], [0], [1], [0, 0, 1, 1], [], []>} : vector<16x128xbf16>, vector<128x512xbf16>, vector<16x512xf32> -> vector<16x512xf32>
    %173 = arith.mulf %56, %172 : vector<16x512xf32>
    %174 = vector.extract_strided_slice %173 {offsets = [0, 0], sizes = [16, 128], strides = [1, 1]} : vector<16x512xf32> to vector<16x128xf32>
    %175 = vector.extract_strided_slice %173 {offsets = [0, 128], sizes = [16, 128], strides = [1, 1]} : vector<16x512xf32> to vector<16x128xf32>
    %176 = arith.addf %174, %175 : vector<16x128xf32>
    %177 = vector.extract_strided_slice %173 {offsets = [0, 256], sizes = [16, 128], strides = [1, 1]} : vector<16x512xf32> to vector<16x128xf32>
    %178 = arith.addf %176, %177 : vector<16x128xf32>
    %179 = vector.extract_strided_slice %173 {offsets = [0, 384], sizes = [16, 128], strides = [1, 1]} : vector<16x512xf32> to vector<16x128xf32>
    %180 = arith.addf %178, %179 : vector<16x128xf32>
    %181 = arith.mulf %163, %180 : vector<16x128xf32>
    %182 = arith.truncf %181 : vector<16x128xf32> to vector<16x128xbf16>
    %cst_73 = arith.constant dense<0.000000e+00> : vector<8x128xf32>
    %183 = tpu.matmul %86, %182, %cst_73 {dimension_numbers = #tpu.dot_dimension_numbers<[1], [0], [0], [1], [0, 0, 1, 1], [], []>} : vector<8x16xbf16>, vector<16x128xbf16>, vector<8x128xf32> -> vector<8x128xf32>
    %cst_74 = arith.constant 0.707106769 : f32
    %184 = vector.broadcast %cst_74 : f32 to vector<8x128xf32>
    %185 = arith.mulf %183, %184 : vector<8x128xf32>
    %186 = arith.truncf %185 : vector<8x128xf32> to vector<8x128xbf16>
    %cst_75 = arith.constant dense<0.000000e+00> : vector<8x128xf32>
    %187 = tpu.matmul %186, %158, %cst_75 {dimension_numbers = #tpu.dot_dimension_numbers<[1], [0], [0], [1], [0, 0, 1, 1], [], []>} : vector<8x128xbf16>, vector<128x128xbf16>, vector<8x128xf32> -> vector<8x128xf32>
    %188 = arith.addf %160, %187 : vector<8x128xf32>
    %189 = tpu.iota {dimensions = array<i32: 1>} : vector<8x128xi32>
    %190 = arith.negf %188 : vector<8x128xf32>
    %191 = math.exp %190 : vector<8x128xf32>
    %cst_76 = arith.constant 1.000000e+00 : f32
    %192 = vector.broadcast %cst_76 : f32 to vector<8x128xf32>
    %193 = arith.addf %192, %191 : vector<8x128xf32>
    %194 = arith.divf %192, %193 : vector<8x128xf32>
    %c112_i32_77 = arith.constant 112 : i32
    %195 = tpu.dynamic_rotate %188 by %c112_i32_77 dim 1 : vector<8x128xf32>, i32 -> vector<8x128xf32>
    %196 = arith.mulf %195, %194 : vector<8x128xf32>
    %c16_i32_78 = arith.constant 16 : i32
    %197 = vector.broadcast %c16_i32_78 : i32 to vector<8x128xi32>
    %198 = arith.cmpi slt, %189, %197 : vector<8x128xi32>
    %199 = arith.mulf %188, %194 : vector<8x128xf32>
    %c32_i32_79 = arith.constant 32 : i32
    %200 = vector.broadcast %c32_i32_79 : i32 to vector<8x128xi32>
    %201 = arith.cmpi slt, %189, %200 : vector<8x128xi32>
    %cst_80 = arith.constant 0.000000e+00 : f32
    %202 = vector.broadcast %cst_80 : f32 to vector<8x128xf32>
    %203 = arith.select %201, %196, %202 : vector<8x128xi1>, vector<8x128xf32>
    %204 = arith.select %198, %199, %203 : vector<8x128xi1>, vector<8x128xf32>
    %205 = arith.truncf %204 : vector<8x128xf32> to vector<8x128xbf16>
    %c2 = arith.constant 2 : index
    %c0_81 = arith.constant 0 : index
    %c0_82 = arith.constant 0 : index
    %206 = vector.load %arg6[%c2, %c0_81, %c0_82] : memref<3x128x128xbf16, #tpu.memory_space<vmem>>, vector<1x128x128xbf16>
    %207 = vector.shape_cast %206 : vector<1x128x128xbf16> to vector<128x128xbf16>
    %c2_83 = arith.constant 2 : index
    %c0_84 = arith.constant 0 : index
    %c0_85 = arith.constant 0 : index
    %208 = vector.load %arg7[%c2_83, %c0_84, %c0_85] : memref<3x128x128xbf16, #tpu.memory_space<vmem>>, vector<1x128x128xbf16>
    %209 = vector.shape_cast %208 : vector<1x128x128xbf16> to vector<128x128xbf16>
    %c2_86 = arith.constant 2 : index
    %c0_87 = arith.constant 0 : index
    %c0_88 = arith.constant 0 : index
    %210 = vector.load %arg8[%c2_86, %c0_87, %c0_88] : memref<3x128x128xbf16, #tpu.memory_space<vmem>>, vector<1x128x128xbf16>
    %211 = vector.shape_cast %210 : vector<1x128x128xbf16> to vector<128x128xbf16>
    %c2_89 = arith.constant 2 : index
    %c0_90 = arith.constant 0 : index
    %c0_91 = arith.constant 0 : index
    %212 = vector.load %arg9[%c2_89, %c0_90, %c0_91] : memref<3x128x512xbf16, #tpu.memory_space<vmem>>, vector<1x128x512xbf16>
    %213 = vector.shape_cast %212 : vector<1x128x512xbf16> to vector<128x512xbf16>
    %c2_92 = arith.constant 2 : index
    %c0_93 = arith.constant 0 : index
    %c0_94 = arith.constant 0 : index
    %214 = vector.load %arg10[%c2_92, %c0_93, %c0_94] : memref<3x128x128xbf16, #tpu.memory_space<vmem>>, vector<1x128x128xbf16>
    %215 = vector.shape_cast %214 : vector<1x128x128xbf16> to vector<128x128xbf16>
    %cst_95 = arith.constant dense<0.000000e+00> : vector<8x128xf32>
    %216 = tpu.matmul %205, %207, %cst_95 {dimension_numbers = #tpu.dot_dimension_numbers<[1], [0], [0], [1], [0, 0, 1, 1], [], []>} : vector<8x128xbf16>, vector<128x128xbf16>, vector<8x128xf32> -> vector<8x128xf32>
    %217 = arith.mulf %216, %89 : vector<8x128xf32>
    %cst_96 = arith.constant dense<0.000000e+00> : vector<8x128xf32>
    %218 = tpu.matmul %205, %209, %cst_96 {dimension_numbers = #tpu.dot_dimension_numbers<[1], [0], [0], [1], [0, 0, 1, 1], [], []>} : vector<8x128xbf16>, vector<128x128xbf16>, vector<8x128xf32> -> vector<8x128xf32>
    %219 = arith.truncf %218 : vector<8x128xf32> to vector<8x128xbf16>
    %cst_97 = arith.constant dense<0.000000e+00> : vector<16x128xf32>
    %220 = tpu.matmul %80, %219, %cst_97 {dimension_numbers = #tpu.dot_dimension_numbers<[1], [0], [0], [1], [0, 0, 1, 1], [], []>} : vector<16x8xbf16>, vector<8x128xbf16>, vector<16x128xf32> -> vector<16x128xf32>
    %cst_98 = arith.constant dense<0.000000e+00> : vector<16x128xf32>
    %221 = tpu.matmul %72, %211, %cst_98 {dimension_numbers = #tpu.dot_dimension_numbers<[1], [0], [0], [1], [0, 0, 1, 1], [], []>} : vector<16x128xbf16>, vector<128x128xbf16>, vector<16x128xf32> -> vector<16x128xf32>
    %222 = arith.negf %221 : vector<16x128xf32>
    %223 = math.exp %222 : vector<16x128xf32>
    %cst_99 = arith.constant 1.000000e+00 : f32
    %224 = vector.broadcast %cst_99 : f32 to vector<16x128xf32>
    %225 = arith.addf %224, %223 : vector<16x128xf32>
    %226 = arith.divf %224, %225 : vector<16x128xf32>
    %227 = arith.mulf %221, %226 : vector<16x128xf32>
    %228 = arith.truncf %227 : vector<16x128xf32> to vector<16x128xbf16>
    %cst_100 = arith.constant dense<0.000000e+00> : vector<16x512xf32>
    %229 = tpu.matmul %228, %213, %cst_100 {dimension_numbers = #tpu.dot_dimension_numbers<[1], [0], [0], [1], [0, 0, 1, 1], [], []>} : vector<16x128xbf16>, vector<128x512xbf16>, vector<16x512xf32> -> vector<16x512xf32>
    %230 = arith.mulf %56, %229 : vector<16x512xf32>
    %231 = vector.extract_strided_slice %230 {offsets = [0, 0], sizes = [16, 128], strides = [1, 1]} : vector<16x512xf32> to vector<16x128xf32>
    %232 = vector.extract_strided_slice %230 {offsets = [0, 128], sizes = [16, 128], strides = [1, 1]} : vector<16x512xf32> to vector<16x128xf32>
    %233 = arith.addf %231, %232 : vector<16x128xf32>
    %234 = vector.extract_strided_slice %230 {offsets = [0, 256], sizes = [16, 128], strides = [1, 1]} : vector<16x512xf32> to vector<16x128xf32>
    %235 = arith.addf %233, %234 : vector<16x128xf32>
    %236 = vector.extract_strided_slice %230 {offsets = [0, 384], sizes = [16, 128], strides = [1, 1]} : vector<16x512xf32> to vector<16x128xf32>
    %237 = arith.addf %235, %236 : vector<16x128xf32>
    %238 = arith.mulf %220, %237 : vector<16x128xf32>
    %239 = arith.truncf %238 : vector<16x128xf32> to vector<16x128xbf16>
    %cst_101 = arith.constant dense<0.000000e+00> : vector<8x128xf32>
    %240 = tpu.matmul %86, %239, %cst_101 {dimension_numbers = #tpu.dot_dimension_numbers<[1], [0], [0], [1], [0, 0, 1, 1], [], []>} : vector<8x16xbf16>, vector<16x128xbf16>, vector<8x128xf32> -> vector<8x128xf32>
    %cst_102 = arith.constant 0.707106769 : f32
    %241 = vector.broadcast %cst_102 : f32 to vector<8x128xf32>
    %242 = arith.mulf %240, %241 : vector<8x128xf32>
    %243 = arith.truncf %242 : vector<8x128xf32> to vector<8x128xbf16>
    %cst_103 = arith.constant dense<0.000000e+00> : vector<8x128xf32>
    %244 = tpu.matmul %243, %215, %cst_103 {dimension_numbers = #tpu.dot_dimension_numbers<[1], [0], [0], [1], [0, 0, 1, 1], [], []>} : vector<8x128xbf16>, vector<128x128xbf16>, vector<8x128xf32> -> vector<8x128xf32>
    %245 = arith.addf %217, %244 : vector<8x128xf32>
    %c0_104 = arith.constant 0 : index
    %c0_105 = arith.constant 0 : index
    %246 = vector.load %arg5[%c0_104, %c0_105] : memref<8x8xf32, #tpu.memory_space<vmem>>, vector<8x8xf32>
    %cst_106 = arith.constant dense<0.000000e+00> : vector<8x128xf32>
    %247 = tpu.matmul %246, %245, %cst_106 {dimension_numbers = #tpu.dot_dimension_numbers<[1], [0], [0], [1], [0, 0, 1, 1], [], []>} : vector<8x8xf32>, vector<8x128xf32>, vector<8x128xf32> -> vector<8x128xf32>
    %c0_107 = arith.constant 0 : index
    %c0_108 = arith.constant 0 : index
    %248 = vector.load %arg11[%c0_107, %c0_108] : memref<8x128xf32, #tpu.memory_space<vmem>>, vector<8x128xf32>
    tpu.vector_store %arg11[%c0_107, %c0_108], %247 {strides = array<i32>} : memref<8x128xf32, #tpu.memory_space<vmem>>, vector<8x128xf32>,
    return
  }
}

</mosaic_0001>

<llo_original>
// kernel: tpu_custom_call.1
$region0: #{tpu_custom_call.1}
  #allocation0 [shape = 'u32[]', space=smem, size = 0x4, offset = 0x4, fixed_abs, tag = 'smem constant byte address 0x4 - core index']
  #allocation1 [shape = 'u32[72,128]{1,0:T(1,128)}', space=vmem, size = 0x9000, scoped, tag = 'internal scratch']
  %s0 = inlined_call_operand.vmem [shape: f32[8,128], index: 0, kind: input, shape index: {}]
  %s1 = inlined_call_operand.vmem [shape: f32[8,1], index: 1, kind: input, shape index: {}]
  %s2 = inlined_call_operand.vmem [shape: f32[16,3], index: 2, kind: input, shape index: {}]
  %s3 = inlined_call_operand.vmem [shape: s32[16,1], index: 3, kind: input, shape index: {}]
  %s4 = inlined_call_operand.vmem [shape: s32[1,16], index: 4, kind: input, shape index: {}]
  %s5 = inlined_call_operand.vmem [shape: f32[8,8], index: 5, kind: input, shape index: {}]
  %s6 = inlined_call_operand.hbm [shape: bf16[3,128,128], index: 6, kind: input, shape index: {}]
  %s7 = inlined_call_operand.hbm [shape: bf16[3,128,128], index: 7, kind: input, shape index: {}]
  %s8 = inlined_call_operand.hbm [shape: bf16[3,128,128], index: 8, kind: input, shape index: {}]
  %s9 = inlined_call_operand.hbm [shape: bf16[3,128,512], index: 9, kind: input, shape index: {}]
  %s10 = inlined_call_operand.hbm [shape: bf16[3,128,128], index: 10, kind: input, shape index: {}]
  %s11 = inlined_call_operand.hbm [shape: f32[8,128], index: 11, kind: output, shape index: {}]
  %s12 = sld [smem:[#allocation0]]
  $region74: #{tpu_custom_call.1} parent=0
    _
  %s14 = ssub.s32 1, %s12
  %s15 = scalar_select 0, %s14, %s12
  $region1: #{tpu_custom_call.1} parent=0
    #allocation2 [shape = 'u8[98304]{0}', space=vmem, size = 0x18000, scoped, tag = 'input window, operand 6, single buffered']
    #allocation3 [shape = 's32[1]{0}', space=sflag, size = 0x4, scoped, tag = 'scoped memory for tpu_custom_call.1']
    #allocation4 [shape = 's32[1]{0}', space=sflag, size = 0x4, scoped, tag = 'scoped memory for tpu_custom_call.1']
    #allocation5 [shape = 'u8[98304]{0}', space=vmem, size = 0x18000, scoped, tag = 'input window, operand 7, single buffered']
    #allocation6 [shape = 's32[1]{0}', space=sflag, size = 0x4, scoped, tag = 'scoped memory for tpu_custom_call.1']
    #allocation7 [shape = 'u8[98304]{0}', space=vmem, size = 0x18000, scoped, tag = 'input window, operand 8, single buffered']
    #allocation8 [shape = 'u8[393216]{0}', space=vmem, size = 0x60000, scoped, tag = 'input window, operand 9, single buffered']
    #allocation9 [shape = 's32[1]{0}', space=sflag, size = 0x4, scoped, tag = 'scoped memory for tpu_custom_call.1']
    #allocation10 [shape = 'u8[98304]{0}', space=vmem, size = 0x18000, scoped, tag = 'input window, operand 10, single buffered']
    #allocation11 [shape = 'u8[4096]{0}', space=vmem, size = 0x1000, scoped, tag = 'output window, operand 0, single buffered']
    %16 = vsyncpa [#allocation3], 0
    %17 = vsyncpa [#allocation6], 0
    %18 = vsyncpa [#allocation9], 0
    %19 = vsyncpa [#allocation4], 0
    // Predicated region
    $region2: #{tpu_custom_call.1} parent=1 // pred_check
      _
    $region3: #{tpu_custom_call.1} parent=1 // pred_check_branch
      %21 = sbr.rel (0) target = $region5
    $region4: #{tpu_custom_call.1} parent=1 // pred_region
      _
    $region5: #{tpu_custom_call.1} parent=1 // pred_fallthru
      _
    // Predicated region
    $region6: #{tpu_custom_call.1} parent=1 // pred_check
      _
    $region7: #{tpu_custom_call.1} parent=1 // pred_check_branch
      %23 = sbr.rel (0) target = $region9
    $region8: #{tpu_custom_call.1} parent=1 // pred_region
      _
    $region9: #{tpu_custom_call.1} parent=1 // pred_fallthru
      _
    // Predicated region
    $region10: #{tpu_custom_call.1} parent=1 // pred_check
      _
    $region11: #{tpu_custom_call.1} parent=1 // pred_check_branch
      %25 = sbr.rel (0) target = $region13
    $region12: #{tpu_custom_call.1} parent=1 // pred_region
      _
    $region13: #{tpu_custom_call.1} parent=1 // pred_fallthru
      _
    // Predicated region
    $region14: #{tpu_custom_call.1} parent=1 // pred_check
      _
    $region15: #{tpu_custom_call.1} parent=1 // pred_check_branch
      %27 = sbr.rel (0) target = $region17
    $region16: #{tpu_custom_call.1} parent=1 // pred_region
      _
    $region17: #{tpu_custom_call.1} parent=1 // pred_fallthru
      _
    // Predicated region
    $region18: #{tpu_custom_call.1} parent=1 // pred_check
      _
    $region19: #{tpu_custom_call.1} parent=1 // pred_check_branch
      %29 = sbr.rel (0) target = $region21
    $region20: #{tpu_custom_call.1} parent=1 // pred_region
      _
    $region21: #{tpu_custom_call.1} parent=1 // pred_fallthru
      _
    // Predicated region
    $region22: #{tpu_custom_call.1} parent=1 // pred_check
      _
    $region23: #{tpu_custom_call.1} parent=1 // pred_check_branch
      %31 = sbr.rel (0) target = $region25
    $region24: #{tpu_custom_call.1} parent=1 // pred_region
      _
    $region25: #{tpu_custom_call.1} parent=1 // pred_fallthru
      _
    // Predicated region
    $region26: #{tpu_custom_call.1} parent=1 // pred_check
      _
    $region27: #{tpu_custom_call.1} parent=1 // pred_check_branch
      %33 = sbr.rel (0) target = $region29
    $region28: #{tpu_custom_call.1} parent=1 // pred_region
      %35 = vsyncadd [#allocation3], 0
      %s36 = sshll.u32 %s6, 4
      %s37 = int_to_ptr.hbm [resolvable:$true] %s36
      %s38 = sshll.u32 [#allocation2], 4
      %s39 = int_to_ptr.vmem [resolvable:$true] %s38
      %44 = dma.hbm_to_vmem [thread:$0]  %s37, 3072, %s39, [#allocation3], 64, 64, 4
    $region29: #{tpu_custom_call.1} parent=1 // pred_fallthru
      _
    // Predicated region
    $region30: #{tpu_custom_call.1} parent=1 // pred_check
      _
    $region31: #{tpu_custom_call.1} parent=1 // pred_check_branch
      %46 = sbr.rel (0) target = $region33
    $region32: #{tpu_custom_call.1} parent=1 // pred_region
      %48 = vsyncadd [#allocation6], 0
      %s49 = sshll.u32 %s7, 4
      %s50 = int_to_ptr.hbm [resolvable:$true] %s49
      %s51 = sshll.u32 [#allocation5], 4
      %s52 = int_to_ptr.vmem [resolvable:$true] %s51
      %57 = dma.hbm_to_vmem [thread:$0]  %s50, 3072, %s52, [#allocation6], 64, 64, 4
    $region33: #{tpu_custom_call.1} parent=1 // pred_fallthru
      _
    // Predicated region
    $region34: #{tpu_custom_call.1} parent=1 // pred_check
      _
    $region35: #{tpu_custom_call.1} parent=1 // pred_check_branch
      %59 = sbr.rel (0) target = $region37
    $region36: #{tpu_custom_call.1} parent=1 // pred_region
      %61 = vsyncadd [#allocation6], 0
      %s62 = sshll.u32 %s8, 4
      %s63 = int_to_ptr.hbm [resolvable:$true] %s62
      %s64 = sshll.u32 [#allocation7], 4
      %s65 = int_to_ptr.vmem [resolvable:$true] %s64
      %70 = dma.hbm_to_vmem [thread:$0]  %s63, 3072, %s65, [#allocation6], 64, 64, 4
    $region37: #{tpu_custom_call.1} parent=1 // pred_fallthru
      _
    // Predicated region
    $region38: #{tpu_custom_call.1} parent=1 // pred_check
      _
    $region39: #{tpu_custom_call.1} parent=1 // pred_check_branch
      %72 = sbr.rel (0) target = $region41
    $region40: #{tpu_custom_call.1} parent=1 // pred_region
      %74 = vsyncadd [#allocation9], 0
      %s75 = sshll.u32 %s9, 4
      %s76 = int_to_ptr.hbm [resolvable:$true] %s75
      %s77 = sshll.u32 [#allocation8], 4
      %s78 = int_to_ptr.vmem [resolvable:$true] %s77
      %83 = dma.hbm_to_vmem [thread:$0]  %s76, 12288, %s78, [#allocation9], 256, 256, 16
    $region41: #{tpu_custom_call.1} parent=1 // pred_fallthru
      _
    // Predicated region
    $region42: #{tpu_custom_call.1} parent=1 // pred_check
      _
    $region43: #{tpu_custom_call.1} parent=1 // pred_check_branch
      %85 = sbr.rel (0) target = $region45
    $region44: #{tpu_custom_call.1} parent=1 // pred_region
      %87 = vsyncadd [#allocation9], 0
      %s88 = sshll.u32 %s10, 4
      %s89 = int_to_ptr.hbm [resolvable:$true] %s88
      %s90 = sshll.u32 [#allocation10], 4
      %s91 = int_to_ptr.vmem [resolvable:$true] %s90
      %96 = dma.hbm_to_vmem [thread:$0]  %s89, 3072, %s91, [#allocation9], 64, 64, 4
    $region45: #{tpu_custom_call.1} parent=1 // pred_fallthru
      _
    // Predicated region
    $region46: #{tpu_custom_call.1} parent=1 // pred_check
      _
    $region47: #{tpu_custom_call.1} parent=1 // pred_check_branch
      %98 = sbr.rel (0) target = $region49
    $region48: #{tpu_custom_call.1} parent=1 // pred_region
      %100 = dma.done [#allocation3], 3072
    $region49: #{tpu_custom_call.1} parent=1 // pred_fallthru
      _
    // Predicated region
    $region50: #{tpu_custom_call.1} parent=1 // pred_check
      _
    $region51: #{tpu_custom_call.1} parent=1 // pred_check_branch
      %102 = sbr.rel (0) target = $region53
    $region52: #{tpu_custom_call.1} parent=1 // pred_region
      %104 = dma.done [#allocation6], 3072
    $region53: #{tpu_custom_call.1} parent=1 // pred_fallthru
      _
    // Predicated region
    $region54: #{tpu_custom_call.1} parent=1 // pred_check
      _
    $region55: #{tpu_custom_call.1} parent=1 // pred_check_branch
      %106 = sbr.rel (0) target = $region57
    $region56: #{tpu_custom_call.1} parent=1 // pred_region
      %108 = dma.done [#allocation6], 3072
    $region57: #{tpu_custom_call.1} parent=1 // pred_fallthru
      _
    // Predicated region
    $region58: #{tpu_custom_call.1} parent=1 // pred_check
      _
    $region59: #{tpu_custom_call.1} parent=1 // pred_check_branch
      %110 = sbr.rel (0) target = $region61
    $region60: #{tpu_custom_call.1} parent=1 // pred_region
      %112 = dma.done [#allocation9], 12288
    $region61: #{tpu_custom_call.1} parent=1 // pred_fallthru
      _
    // Predicated region
    $region62: #{tpu_custom_call.1} parent=1 // pred_check
      _
    $region63: #{tpu_custom_call.1} parent=1 // pred_check_branch
      %114 = sbr.rel (0) target = $region65
    $region64: #{tpu_custom_call.1} parent=1 // pred_region
      %116 = dma.done [#allocation9], 3072
    $region65: #{tpu_custom_call.1} parent=1 // pred_fallthru
      _
    %v118 = vld [vmem:[%s2] sm:$0xff]
    %v119 = vld [vmem:[%s2 + $0x8] sm:$0xff]
    %v120 = vmul.f32 %v118, %v118
    %v121 = vmul.f32 %v119, %v119
    %124 = vrot.lane.b32.xlu0 %v120, 127
    %v125 = vpop.permute.xlu0 %124
    %126 = vrot.lane.b32.xlu0 %v121, 127
    %v127 = vpop.permute.xlu0 %126
    %v130 = vadd.f32 %v120, %v125
    %v131 = vadd.f32 %v121, %v127
    %132 = vrot.lane.b32.xlu0 %v120, 126
    %v133 = vpop.permute.xlu0 %132
    %134 = vrot.lane.b32.xlu0 %v121, 126
    %v135 = vpop.permute.xlu0 %134
    %v138 = vadd.f32 %v130, %v133
    %v139 = vadd.f32 %v131, %v135
    %v140 = vadd.f32 %v138, 1e-12
    %v141 = vadd.f32 %v139, 1e-12
    %v142 = vrsqrt.pop %v140
    %v143 = vmul.f32 %v142, %v140
    %v144 = vmul.f32 %v143, %v142
    %v145 = vmul.f32 0.5, %v144
    %v146 = vsub.f32 1.5, %v145
    %v147 = vmul.f32 %v142, %v146
    %vm148 = vweird.f32 %v140
    %vm149 = vweird.f32 %v142
    %vm150 = vmor %vm148, %vm149
    %v151 = vsel %vm150, %v142, %v147
    %v152 = vrsqrt.pop %v141
    %v153 = vmul.f32 %v152, %v141
    %v154 = vmul.f32 %v153, %v152
    %v155 = vmul.f32 0.5, %v154
    %v156 = vsub.f32 1.5, %v155
    %v157 = vmul.f32 %v152, %v156
    %vm158 = vweird.f32 %v141
    %vm159 = vweird.f32 %v152
    %vm160 = vmor %vm158, %vm159
    %v161 = vsel %vm160, %v152, %v157
    %v162 = vmul.f32 %v138, %v151
    %v163 = vmul.f32 %v139, %v161
    %v164 = vmul.f32 %v118, 1.7320508
    %v165 = vmul.f32 %v119, 1.7320508
    %168 = vrot.lane.b32.xlu0 %v151, 1
    %v169 = vpop.permute.xlu0 %168
    %170 = vrot.lane.b32.xlu0 %v161, 1
    %v171 = vpop.permute.xlu0 %170
    %v174 = vmul.f32 %v164, %v169
    %v175 = vmul.f32 %v165, %v171
    %176 = vrot.lane.b32.xlu0 %v151, 2
    %v177 = vpop.permute.xlu0 %176
    %178 = vrot.lane.b32.xlu0 %v161, 2
    %v179 = vpop.permute.xlu0 %178
    %v182 = vmul.f32 %v164, %v177
    %v183 = vmul.f32 %v165, %v179
    %v184 = vmul.f32 %v164, %v151
    %v185 = vmul.f32 %v165, %v161
    %v186 = vmul.f32 %v162, 0.5
    %v187 = vmul.f32 %v163, 0.5
    %v188 = vsub.f32 %v186, 1.0
    %v189 = vsub.f32 %v187, 1.0
    %v190 = vmul.f32 %v188, 2.0
    %v191 = vmul.f32 %v189, 2.0
    %v192 = vmul.f32 %v190, 3.1415927
    %v193 = vmul.f32 %v191, 3.1415927
    %v194 = vand.u32 2147483647, %v192
    %vm195 = vcmp.le.f32.partialorder %v194, 0.7853982
    %vm196 = vcmp.lt.s32.totalorder %v192, 0
    %v197 = vand.u32 %v192, 2139095040
    %v198 = vshrl.u32 %v197, 23
    %v199 = vsub.s32 %v198, 127
    %v200 = vand.u32 2147483647, %v192
    %v201 = vand.u32 %v200, 8388607
    %v202 = vor.u32 %v201, 8388608
    %v203 = vsub.s32 0, %v202
    %v204 = vadd.s32 %v199, 1
    %vm205 = vcmp.gt.s32.totalorder %v204, 0
    %v206 = vsel %vm205, %v204, 0
    %v207 = vshrl.u32 %v206, 5
    %v208 = vand.u32 %v206, 31
    %v209 = vsub.s32 32, %v208
    %v210 = vshrl.u32 683565275, %v209
    %v211 = vshll.u32 683565275, %v208
    %v212 = vshrl.u32 2475754826, %v209
    %v213 = vor.u32 %v211, %v212
    %v214 = vshll.u32 2475754826, %v208
    %v215 = vshrl.u32 2131351028, %v209
    %v216 = vor.u32 %v214, %v215
    %v217 = vshll.u32 2131351028, %v208
    %v218 = vshrl.u32 2102212464, %v209
    %v219 = vor.u32 %v217, %v218
    %v220 = vshll.u32 2102212464, %v208
    %v221 = vshrl.u32 920167782, %v209
    %v222 = vor.u32 %v220, %v221
    %v223 = vshll.u32 920167782, %v208
    %v224 = vshrl.u32 1326507024, %v209
    %v225 = vor.u32 %v223, %v224
    %vm226 = vcmp.lt.s32.totalorder %v207, 1
    %vm227 = vcmp.lt.s32.totalorder %v207, 2
    %vm228 = vcmp.lt.s32.totalorder %v207, 3
    %vm229 = vcmp.lt.s32.totalorder %v207, 4
    %v230 = vsel %vm226, %v210, %v213
    %v231 = vsel %vm229, %v219, 2102212464
    %v232 = vsel %vm228, %v216, %v231
    %v233 = vsel %vm227, %v230, %v232
    %v234 = vsel %vm226, %v213, %v216
    %v235 = vsel %vm229, %v222, 920167782
    %v236 = vsel %vm228, %v219, %v235
    %v237 = vsel %vm227, %v234, %v236
    %v238 = vsel %vm226, %v216, %v219
    %v239 = vsel %vm229, %v225, 1326507024
    %v240 = vsel %vm228, %v222, %v239
    %v241 = vsel %vm227, %v238, %v240
    %v242 = vshll.u32 %v202, 8
    %v243 = vand.u32 %v242, 65535
    %v244 = vshrl.u32 %v242, 16
    %v245 = vand.u32 %v241, 65535
    %v246 = vshrl.u32 %v241, 16
    %v247 = vmul.u32 %v243, %v245
    %v248 = vmul.u32 %v243, %v246
    %v249 = vmul.u32 %v244, %v245
    %v250 = vmul.u32 %v244, %v246
    %v251 = vshll.u32 %v248, 16
    %v252 = vshrl.u32 %v248, 16
    %v253 = vshll.u32 %v249, 16
    %v254 = vshrl.u32 %v249, 16
    %vm255 = vc.u32 %v247, %v251
    %v256 = vsel %vm255, 1, 0
    %v257 = vadd.s32 %v247, %v251
    %v258 = vadd.s32 %v250, %v256
    %vm259 = vc.u32 %v257, %v253
    %v260 = vsel %vm259, 1, 0
    %v261 = vadd.s32 %v257, %v253
    %v262 = vadd.s32 %v258, %v260
    %v263 = vadd.s32 %v262, %v252
    %v264 = vadd.s32 %v263, %v254
    %v265 = vand.u32 %v242, 65535
    %v266 = vshrl.u32 %v242, 16
    %v267 = vand.u32 %v237, 65535
    %v268 = vshrl.u32 %v237, 16
    %v269 = vmul.u32 %v265, %v267
    %v270 = vmul.u32 %v265, %v268
    %v271 = vmul.u32 %v266, %v267
    %v272 = vmul.u32 %v266, %v268
    %v273 = vshll.u32 %v270, 16
    %v274 = vshrl.u32 %v270, 16
    %v275 = vshll.u32 %v271, 16
    %v276 = vshrl.u32 %v271, 16
    %vm277 = vc.u32 %v269, %v273
    %v278 = vsel %vm277, 1, 0
    %v279 = vadd.s32 %v269, %v273
    %v280 = vadd.s32 %v272, %v278
    %vm281 = vc.u32 %v279, %v275
    %v282 = vsel %vm281, 1, 0
    %v283 = vadd.s32 %v279, %v275
    %v284 = vadd.s32 %v280, %v282
    %v285 = vadd.s32 %v284, %v274
    %v286 = vadd.s32 %v285, %v276
    %v287 = vmul.u32 %v242, %v233
    %v288 = vadd.s32 %v264, %v283
    %vm289 = vc.u32 %v264, %v283
    %v290 = vadd.s32 %v286, 1
    %v291 = vsel %vm289, %v290, %v286
    %v292 = vadd.s32 %v287, %v291
    %v293 = vadd.s32 %v292, 536870912
    %v294 = vshrl.u32 %v293, 30
    %v295 = vshll.u32 %v294, 30
    %v296 = vsub.s32 %v292, %v295
    %vm297 = vcmp.lt.s32.totalorder %v296, 0
    %v298 = vsub.s32 0, %v296
    %v299 = vsel %vm297, %v298, %v296
    %v300 = vclz %v299
    %v301 = vsub.s32 %v300, 2
    %vm302 = vcmp.gt.s32.totalorder 0, %v301
    %v303 = vsel %vm302, 0, %v301
    %v304 = vsub.s32 32, %v303
    %v305 = vshll.u32 %v296, %v303
    %v306 = vshrl.u32 %v288, %v304
    %v307 = vor.u32 %v305, %v306
    %v308 = vsub.s32 4294967266, %v303
    %v309 = vadd.s32 %v308, 127
    %v310 = vshll.u32 %v309, 23
    %v311 = vor.u32 4788187, %v310
    %v312 = vand.u32 2147483647, %v311
    %v314 = vcvt.s32.f32 %v307
    %v315 = vmul.f32 %v314, %v312
    %v316 = vxor.u32 %v315, 2147483648
    %v317 = vsel %vm196, %v316, %v315
    %v318 = vsub.s32 4, %v294
    %v319 = vsel %vm196, %v318, %v294
    %v320 = vsel %vm195, %v192, %v317
    %v321 = vsel %vm195, 0, %v319
    %v322 = vmul.f32 %v320, %v320
    %v323 = vmul.f32 %v322, -0.001358992
    %v324 = vadd.f32 %v323, 0.041655596
    %v325 = vmul.f32 %v322, %v324
    %v326 = vadd.f32 %v325, -0.4999988
    %v327 = vmul.f32 %v322, %v326
    %v328 = vadd.f32 1.0, %v327
    %v329 = vmul.f32 %v320, %v320
    %v330 = vmul.f32 %v329, -0.00019511016
    %v331 = vadd.f32 %v330, 0.008332121
    %v332 = vmul.f32 %v329, %v331
    %v333 = vadd.f32 %v332, -0.16666654
    %v334 = vmul.f32 %v329, %v333
    %v335 = vadd.f32 %v334, 1.0
    %v336 = vmul.f32 %v335, %v320
    %vm337 = vweird.f32 %v192
    %v338 = vand.u32 %v321, 3
    %vm339 = vcmp.lt.s32.totalorder %v338, 2
    %vm340 = vcmp.eq.s32.totalorder %v338, 0
    %v341 = vxor.u32 %v336, 2147483648
    %v342 = vsel %vm340, %v328, %v341
    %vm343 = vcmp.eq.s32.totalorder %v338, 2
    %v344 = vxor.u32 %v328, 2147483648
    %v345 = vsel %vm343, %v344, %v336
    %v346 = vsel %vm339, %v342, %v345
    %v347 = vsel %vm337, nan, %v346
    %v348 = vand.u32 2147483647, %v193
    %vm349 = vcmp.le.f32.partialorder %v348, 0.7853982
    %vm350 = vcmp.lt.s32.totalorder %v193, 0
    %v351 = vand.u32 %v193, 2139095040
    %v352 = vshrl.u32 %v351, 23
    %v353 = vsub.s32 %v352, 127
    %v354 = vand.u32 2147483647, %v193
    %v355 = vand.u32 %v354, 8388607
    %v356 = vor.u32 %v355, 8388608
    %v357 = vsub.s32 0, %v356
    %v358 = vadd.s32 %v353, 1
    %vm359 = vcmp.gt.s32.totalorder %v358, 0
    %v360 = vsel %vm359, %v358, 0
    %v361 = vshrl.u32 %v360, 5
    %v362 = vand.u32 %v360, 31
    %v363 = vsub.s32 32, %v362
    %v364 = vshrl.u32 683565275, %v363
    %v365 = vshll.u32 683565275, %v362
    %v366 = vshrl.u32 2475754826, %v363
    %v367 = vor.u32 %v365, %v366
    %v368 = vshll.u32 2475754826, %v362
    %v369 = vshrl.u32 2131351028, %v363
    %v370 = vor.u32 %v368, %v369
    %v371 = vshll.u32 2131351028, %v362
    %v372 = vshrl.u32 2102212464, %v363
    %v373 = vor.u32 %v371, %v372
    %v374 = vshll.u32 2102212464, %v362
    %v375 = vshrl.u32 920167782, %v363
    %v376 = vor.u32 %v374, %v375
    %v377 = vshll.u32 920167782, %v362
    %v378 = vshrl.u32 1326507024, %v363
    %v379 = vor.u32 %v377, %v378
    %vm380 = vcmp.lt.s32.totalorder %v361, 1
    %vm381 = vcmp.lt.s32.totalorder %v361, 2
    %vm382 = vcmp.lt.s32.totalorder %v361, 3
    %vm383 = vcmp.lt.s32.totalorder %v361, 4
    %v384 = vsel %vm380, %v364, %v367
    %v385 = vsel %vm383, %v373, 2102212464
    %v386 = vsel %vm382, %v370, %v385
    %v387 = vsel %vm381, %v384, %v386
    %v388 = vsel %vm380, %v367, %v370
    %v389 = vsel %vm383, %v376, 920167782
    %v390 = vsel %vm382, %v373, %v389
    %v391 = vsel %vm381, %v388, %v390
    %v392 = vsel %vm380, %v370, %v373
    %v393 = vsel %vm383, %v379, 1326507024
    %v394 = vsel %vm382, %v376, %v393
    %v395 = vsel %vm381, %v392, %v394
    %v396 = vshll.u32 %v356, 8
    %v397 = vand.u32 %v396, 65535
    %v398 = vshrl.u32 %v396, 16
    %v399 = vand.u32 %v395, 65535
    %v400 = vshrl.u32 %v395, 16
    %v401 = vmul.u32 %v397, %v399
    %v402 = vmul.u32 %v397, %v400
    %v403 = vmul.u32 %v398, %v399
    %v404 = vmul.u32 %v398, %v400
    %v405 = vshll.u32 %v402, 16
    %v406 = vshrl.u32 %v402, 16
    %v407 = vshll.u32 %v403, 16
    %v408 = vshrl.u32 %v403, 16
    %vm409 = vc.u32 %v401, %v405
    %v410 = vsel %vm409, 1, 0
    %v411 = vadd.s32 %v401, %v405
    %v412 = vadd.s32 %v404, %v410
    %vm413 = vc.u32 %v411, %v407
    %v414 = vsel %vm413, 1, 0
    %v415 = vadd.s32 %v411, %v407
    %v416 = vadd.s32 %v412, %v414
    %v417 = vadd.s32 %v416, %v406
    %v418 = vadd.s32 %v417, %v408
    %v419 = vand.u32 %v396, 65535
    %v420 = vshrl.u32 %v396, 16
    %v421 = vand.u32 %v391, 65535
    %v422 = vshrl.u32 %v391, 16
    %v423 = vmul.u32 %v419, %v421
    %v424 = vmul.u32 %v419, %v422
    %v425 = vmul.u32 %v420, %v421
    %v426 = vmul.u32 %v420, %v422
    %v427 = vshll.u32 %v424, 16
    %v428 = vshrl.u32 %v424, 16
    %v429 = vshll.u32 %v425, 16
    %v430 = vshrl.u32 %v425, 16
    %vm431 = vc.u32 %v423, %v427
    %v432 = vsel %vm431, 1, 0
    %v433 = vadd.s32 %v423, %v427
    %v434 = vadd.s32 %v426, %v432
    %vm435 = vc.u32 %v433, %v429
    %v436 = vsel %vm435, 1, 0
    %v437 = vadd.s32 %v433, %v429
    %v438 = vadd.s32 %v434, %v436
    %v439 = vadd.s32 %v438, %v428
    %v440 = vadd.s32 %v439, %v430
    %v441 = vmul.u32 %v396, %v387
    %v442 = vadd.s32 %v418, %v437
    %vm443 = vc.u32 %v418, %v437
    %v444 = vadd.s32 %v440, 1
    %v445 = vsel %vm443, %v444, %v440
    %v446 = vadd.s32 %v441, %v445
    %v447 = vadd.s32 %v446, 536870912
    %v448 = vshrl.u32 %v447, 30
    %v449 = vshll.u32 %v448, 30
    %v450 = vsub.s32 %v446, %v449
    %vm451 = vcmp.lt.s32.totalorder %v450, 0
    %v452 = vsub.s32 0, %v450
    %v453 = vsel %vm451, %v452, %v450
    %v454 = vclz %v453
    %v455 = vsub.s32 %v454, 2
    %vm456 = vcmp.gt.s32.totalorder 0, %v455
    %v457 = vsel %vm456, 0, %v455
    %v458 = vsub.s32 32, %v457
    %v459 = vshll.u32 %v450, %v457
    %v460 = vshrl.u32 %v442, %v458
    %v461 = vor.u32 %v459, %v460
    %v462 = vsub.s32 4294967266, %v457
    %v463 = vadd.s32 %v462, 127
    %v464 = vshll.u32 %v463, 23
    %v465 = vor.u32 4788187, %v464
    %v466 = vand.u32 2147483647, %v465
    %v468 = vcvt.s32.f32 %v461
    %v469 = vmul.f32 %v468, %v466
    %v470 = vxor.u32 %v469, 2147483648
    %v471 = vsel %vm350, %v470, %v469
    %v472 = vsub.s32 4, %v448
    %v473 = vsel %vm350, %v472, %v448
    %v474 = vsel %vm349, %v193, %v471
    %v475 = vsel %vm349, 0, %v473
    %v476 = vmul.f32 %v474, %v474
    %v477 = vmul.f32 %v476, -0.001358992
    %v478 = vadd.f32 %v477, 0.041655596
    %v479 = vmul.f32 %v476, %v478
    %v480 = vadd.f32 %v479, -0.4999988
    %v481 = vmul.f32 %v476, %v480
    %v482 = vadd.f32 1.0, %v481
    %v483 = vmul.f32 %v474, %v474
    %v484 = vmul.f32 %v483, -0.00019511016
    %v485 = vadd.f32 %v484, 0.008332121
    %v486 = vmul.f32 %v483, %v485
    %v487 = vadd.f32 %v486, -0.16666654
    %v488 = vmul.f32 %v483, %v487
    %v489 = vadd.f32 %v488, 1.0
    %v490 = vmul.f32 %v489, %v474
    %vm491 = vweird.f32 %v193
    %v492 = vand.u32 %v475, 3
    %vm493 = vcmp.lt.s32.totalorder %v492, 2
    %vm494 = vcmp.eq.s32.totalorder %v492, 0
    %v495 = vxor.u32 %v490, 2147483648
    %v496 = vsel %vm494, %v482, %v495
    %vm497 = vcmp.eq.s32.totalorder %v492, 2
    %v498 = vxor.u32 %v482, 2147483648
    %v499 = vsel %vm497, %v498, %v490
    %v500 = vsel %vm493, %v496, %v499
    %v501 = vsel %vm491, nan, %v500
    %v502 = vsub.f32 1.0, %v347
    %v503 = vsub.f32 1.0, %v501
    %v504 = vmul.f32 %v502, 0.5
    %v505 = vmul.f32 %v503, 0.5
    %vm506 = vcmp.gt.f32.partialorder %v190, 0.0
    %vm507 = vcmp.gt.f32.partialorder %v191, 0.0
    %v508 = vsel %vm506, 0.0, %v504
    %v509 = vsel %vm507, 0.0, %v505
    %vm510 = vcmp.lt.f32.partialorder %v190, -1.0
    %vm511 = vcmp.lt.f32.partialorder %v191, -1.0
    %v512 = vsel %vm510, 1.0, %v508
    %v513 = vsel %vm511, 1.0, %v509
    %515 = vset.pattern.permute.xlu0 0
    %516 = vperm.xlu0 %515, %v512
    %v517 = vpop.permute.xlu0 %516
    %520 = vset.pattern.permute.xlu0 0
    %521 = vperm.xlu0 %520, %v513
    %v522 = vpop.permute.xlu0 %521
    %526 = vrot.lane.b32.xlu0 %v174, 127
    %v527 = vpop.permute.xlu0 %526
    %528 = vrot.lane.b32.xlu0 %v175, 127
    %v529 = vpop.permute.xlu0 %528
    %v532 = vmul.f32 %v512, %v527
    %v533 = vmul.f32 %v513, %v529
    %535 = vset.pattern.permute.xlu0 0
    %536 = vperm.xlu0 %535, %v532
    %v537 = vpop.permute.xlu0 %536
    %540 = vset.pattern.permute.xlu0 0
    %541 = vperm.xlu0 %540, %v533
    %v542 = vpop.permute.xlu0 %541
    %546 = vrot.lane.b32.xlu0 %v182, 126
    %v547 = vpop.permute.xlu0 %546
    %548 = vrot.lane.b32.xlu0 %v183, 126
    %v549 = vpop.permute.xlu0 %548
    %v552 = vmul.f32 %v512, %v547
    %v553 = vmul.f32 %v513, %v549
    %555 = vset.pattern.permute.xlu0 0
    %556 = vperm.xlu0 %555, %v552
    %v557 = vpop.permute.xlu0 %556
    %560 = vset.pattern.permute.xlu0 0
    %561 = vperm.xlu0 %560, %v553
    %v562 = vpop.permute.xlu0 %561
    %v564 = vmul.f32 %v512, %v184
    %v565 = vmul.f32 %v513, %v185
    %567 = vset.pattern.permute.xlu0 0
    %568 = vperm.xlu0 %567, %v564
    %v569 = vpop.permute.xlu0 %568
    %572 = vset.pattern.permute.xlu0 0
    %573 = vperm.xlu0 %572, %v565
    %v574 = vpop.permute.xlu0 %573
    %v576 = vlaneseq
    %v577 = vand.u32 %v576, 127
    %v578 = vcvt.s32.f32 %v577
    %v579 = vmul.f32 %v578, 0.22222222
    %581 = vset.pattern.permute.xlu0 0
    %582 = vperm.xlu0 %581, %v162
    %v583 = vpop.permute.xlu0 %582
    %586 = vset.pattern.permute.xlu0 0
    %587 = vperm.xlu0 %586, %v163
    %v588 = vpop.permute.xlu0 %587
    %v590 = vsub.f32 %v583, %v579
    %v591 = vsub.f32 %v588, %v579
    %v592 = vmul.f32 %v590, 4.5
    %v593 = vmul.f32 %v591, 4.5
    %v594 = vmul.f32 %v592, %v592
    %v595 = vmul.f32 %v593, %v593
    %v596 = vsub.f32 0.0, %v594
    %v597 = vsub.f32 0.0, %v595
    %v598 = vmul.f32 %v596, 1.442695
    %v599 = vpow.pop %v598
    %v600 = vmul.f32 %v597, 1.442695
    %v601 = vpow.pop %v600
    %v602 = vmul.f32 %v599, 2.8234622
    %v603 = vmul.f32 %v601, 2.8234622
    %v604 = vpack.c.bf16 %v603, %v602
    %v605 = vld [vmem:[%s3] sm:$0xff]
    %v606 = vld [vmem:[%s3 + $0x8] sm:$0xff]
    %v607 = vld [vmem:[%s4] sm:$0x1]
    %608 = vset.pattern.permute.xlu0 0
    %609 = vperm.xlu0 %608, %v605
    %v610 = vpop.permute.xlu0 %609
    %611 = vset.pattern.permute.xlu0 0
    %612 = vperm.xlu0 %611, %v606
    %v613 = vpop.permute.xlu0 %612
    %vm614 = vcmp.eq.s32.totalorder %v577, %v610
    %vm615 = vcmp.eq.s32.totalorder %v577, %v613
    %v616 = vsel %vm614, 1, 0
    %v617 = vsel %vm615, 1, 0
    %v618 = vcvt.s32.f32 %v616
    %v619 = vcvt.s32.f32 %v617
    %v620 = vpack.c.bf16 %v619, %v618
    %v621 = vlaneseq
    %v622 = vshrl.u32 %v621, 7
    %v623 = vperm.slane %v607, 0
    %vm624 = vcmp.eq.s32.totalorder %v622, %v623
    %v625 = vsel %vm624, 1, 0
    %v626 = vcvt.s32.f32 %v625
    %v627 = vpack.c.bf16 %v626, %v626
    %v628 = vld [vmem:[%s1] sm:$0xff]
    %630 = vset.pattern.permute.xlu0 0
    %631 = vperm.xlu0 %630, %v628
    %v632 = vpop.permute.xlu0 %631
    %v634 = vld [vmem:[%s0] sm:$0xff]
    %v635 = vpack.c.bf16 %v634, %v634
    %v636 = vld [vmem:[#allocation2] sm:$0xf]
    %v637 = vld [vmem:[#allocation2 + $0x4] sm:$0xf]
    %v638 = vld [vmem:[#allocation2 + $0x8] sm:$0xf]
    %v639 = vld [vmem:[#allocation2 + $0xc] sm:$0xf]
    %v640 = vld [vmem:[#allocation2 + $0x10] sm:$0xf]
    %v641 = vld [vmem:[#allocation2 + $0x14] sm:$0xf]
    %v642 = vld [vmem:[#allocation2 + $0x18] sm:$0xf]
    %v643 = vld [vmem:[#allocation2 + $0x1c] sm:$0xf]
    %v644 = vld [vmem:[#allocation2 + $0x20] sm:$0xf]
    %v645 = vld [vmem:[#allocation2 + $0x24] sm:$0xf]
    %v646 = vld [vmem:[#allocation2 + $0x28] sm:$0xf]
    %v647 = vld [vmem:[#allocation2 + $0x2c] sm:$0xf]
    %v648 = vld [vmem:[#allocation2 + $0x30] sm:$0xf]
    %v649 = vld [vmem:[#allocation2 + $0x34] sm:$0xf]
    %v650 = vld [vmem:[#allocation2 + $0x38] sm:$0xf]
    %v651 = vld [vmem:[#allocation2 + $0x3c] sm:$0xf]
    %v652 = vld [vmem:[#allocation5] sm:$0xf]
    %v653 = vld [vmem:[#allocation5 + $0x4] sm:$0xf]
    %v654 = vld [vmem:[#allocation5 + $0x8] sm:$0xf]
    %v655 = vld [vmem:[#allocation5 + $0xc] sm:$0xf]
    %v656 = vld [vmem:[#allocation5 + $0x10] sm:$0xf]
    %v657 = vld [vmem:[#allocation5 + $0x14] sm:$0xf]
    %v658 = vld [vmem:[#allocation5 + $0x18] sm:$0xf]
    %v659 = vld [vmem:[#allocation5 + $0x1c] sm:$0xf]
    %v660 = vld [vmem:[#allocation5 + $0x20] sm:$0xf]
    %v661 = vld [vmem:[#allocation5 + $0x24] sm:$0xf]
    %v662 = vld [vmem:[#allocation5 + $0x28] sm:$0xf]
    %v663 = vld [vmem:[#allocation5 + $0x2c] sm:$0xf]
    %v664 = vld [vmem:[#allocation5 + $0x30] sm:$0xf]
    %v665 = vld [vmem:[#allocation5 + $0x34] sm:$0xf]
    %v666 = vld [vmem:[#allocation5 + $0x38] sm:$0xf]
    %v667 = vld [vmem:[#allocation5 + $0x3c] sm:$0xf]
    %v668 = vld [vmem:[#allocation7] sm:$0xf]
    %v669 = vld [vmem:[#allocation7 + $0x4] sm:$0xf]
    %v670 = vld [vmem:[#allocation7 + $0x8] sm:$0xf]
    %v671 = vld [vmem:[#allocation7 + $0xc] sm:$0xf]
    %v672 = vld [vmem:[#allocation7 + $0x10] sm:$0xf]
    %v673 = vld [vmem:[#allocation7 + $0x14] sm:$0xf]
    %v674 = vld [vmem:[#allocation7 + $0x18] sm:$0xf]
    %v675 = vld [vmem:[#allocation7 + $0x1c] sm:$0xf]
    %v676 = vld [vmem:[#allocation7 + $0x20] sm:$0xf]
    %v677 = vld [vmem:[#allocation7 + $0x24] sm:$0xf]
    %v678 = vld [vmem:[#allocation7 + $0x28] sm:$0xf]
    %v679 = vld [vmem:[#allocation7 + $0x2c] sm:$0xf]
    %v680 = vld [vmem:[#allocation7 + $0x30] sm:$0xf]
    %v681 = vld [vmem:[#allocation7 + $0x34] sm:$0xf]
    %v682 = vld [vmem:[#allocation7 + $0x38] sm:$0xf]
    %v683 = vld [vmem:[#allocation7 + $0x3c] sm:$0xf]
    %v684 = vld [vmem:[#allocation8] sm:$0xff]
    %v685 = vld [vmem:[#allocation8 + $0x8] sm:$0xff]
    %v686 = vld [vmem:[#allocation8 + $0x10] sm:$0xff]
    %v687 = vld [vmem:[#allocation8 + $0x18] sm:$0xff]
    %v688 = vld [vmem:[#allocation8 + $0x20] sm:$0xff]
    %v689 = vld [vmem:[#allocation8 + $0x28] sm:$0xff]
    %v690 = vld [vmem:[#allocation8 + $0x30] sm:$0xff]
    %v691 = vld [vmem:[#allocation8 + $0x38] sm:$0xff]
    %v692 = vld [vmem:[#allocation8 + $0x40] sm:$0xff]
    %v693 = vld [vmem:[#allocation8 + $0x48] sm:$0xff]
    %v694 = vld [vmem:[#allocation8 + $0x50] sm:$0xff]
    %v695 = vld [vmem:[#allocation8 + $0x58] sm:$0xff]
    %v696 = vld [vmem:[#allocation8 + $0x60] sm:$0xff]
    %v697 = vld [vmem:[#allocation8 + $0x68] sm:$0xff]
    %v698 = vld [vmem:[#allocation8 + $0x70] sm:$0xff]
    %v699 = vld [vmem:[#allocation8 + $0x78] sm:$0xff]
    %v700 = vld [vmem:[#allocation8 + $0x80] sm:$0xff]
    %v701 = vld [vmem:[#allocation8 + $0x88] sm:$0xff]
    %v702 = vld [vmem:[#allocation8 + $0x90] sm:$0xff]
    %v703 = vld [vmem:[#allocation8 + $0x98] sm:$0xff]
    %v704 = vld [vmem:[#allocation8 + $0xa0] sm:$0xff]
    %v705 = vld [vmem:[#allocation8 + $0xa8] sm:$0xff]
    %v706 = vld [vmem:[#allocation8 + $0xb0] sm:$0xff]
    %v707 = vld [vmem:[#allocation8 + $0xb8] sm:$0xff]
    %v708 = vld [vmem:[#allocation8 + $0xc0] sm:$0xff]
    %v709 = vld [vmem:[#allocation8 + $0xc8] sm:$0xff]
    %v710 = vld [vmem:[#allocation8 + $0xd0] sm:$0xff]
    %v711 = vld [vmem:[#allocation8 + $0xd8] sm:$0xff]
    %v712 = vld [vmem:[#allocation8 + $0xe0] sm:$0xff]
    %v713 = vld [vmem:[#allocation8 + $0xe8] sm:$0xff]
    %v714 = vld [vmem:[#allocation8 + $0xf0] sm:$0xff]
    %v715 = vld [vmem:[#allocation8 + $0xf8] sm:$0xff]
    %v716 = vld [vmem:[#allocation10] sm:$0xf]
    %v717 = vld [vmem:[#allocation10 + $0x4] sm:$0xf]
    %v718 = vld [vmem:[#allocation10 + $0x8] sm:$0xf]
    %v719 = vld [vmem:[#allocation10 + $0xc] sm:$0xf]
    %v720 = vld [vmem:[#allocation10 + $0x10] sm:$0xf]
    %v721 = vld [vmem:[#allocation10 + $0x14] sm:$0xf]
    %v722 = vld [vmem:[#allocation10 + $0x18] sm:$0xf]
    %v723 = vld [vmem:[#allocation10 + $0x1c] sm:$0xf]
    %v724 = vld [vmem:[#allocation10 + $0x20] sm:$0xf]
    %v725 = vld [vmem:[#allocation10 + $0x24] sm:$0xf]
    %v726 = vld [vmem:[#allocation10 + $0x28] sm:$0xf]
    %v727 = vld [vmem:[#allocation10 + $0x2c] sm:$0xf]
    %v728 = vld [vmem:[#allocation10 + $0x30] sm:$0xf]
    %v729 = vld [vmem:[#allocation10 + $0x34] sm:$0xf]
    %v730 = vld [vmem:[#allocation10 + $0x38] sm:$0xf]
    %v731 = vld [vmem:[#allocation10 + $0x3c] sm:$0xf]
    %v748 = vunpack.c.l.b16 %v636
    %v749 = vunpack.c.l.b16 %v637
    %v750 = vunpack.c.l.b16 %v638
    %v751 = vunpack.c.l.b16 %v639
    %v752 = vunpack.c.l.b16 %v640
    %v753 = vunpack.c.l.b16 %v641
    %v754 = vunpack.c.l.b16 %v642
    %v755 = vunpack.c.l.b16 %v643
    %v756 = vunpack.c.l.b16 %v644
    %v757 = vunpack.c.l.b16 %v645
    %v758 = vunpack.c.l.b16 %v646
    %v759 = vunpack.c.l.b16 %v647
    %v760 = vunpack.c.l.b16 %v648
    %v761 = vunpack.c.l.b16 %v649
    %v762 = vunpack.c.l.b16 %v650
    %v763 = vunpack.c.l.b16 %v651
    %v764 = vpack.c.b16 %v749, %v748
    %v765 = vpack.c.b16 %v751, %v750
    %v766 = vpack.c.b16 %v753, %v752
    %v767 = vpack.c.b16 %v755, %v754
    %v768 = vpack.c.b16 %v757, %v756
    %v769 = vpack.c.b16 %v759, %v758
    %v770 = vpack.c.b16 %v761, %v760
    %v771 = vpack.c.b16 %v763, %v762
    %780 = vmatpush.bf16.msra.mxu0 %v771
    %781 = vmatpush.bf16.msra.mxu0 %v770
    %782 = vmatpush.bf16.msra.mxu0 %v769
    %783 = vmatpush.bf16.msra.mxu0 %v768
    %784 = vmatpush.bf16.msra.mxu0 %v767
    %785 = vmatpush.bf16.msra.mxu0 %v766
    %786 = vmatpush.bf16.msra.mxu0 %v765
    %787 = vmatpush.bf16.msra.mxu0 %v764
    %788 = vmatmul.bf16.gmra.mxu0 %v635
    %v789 = vpop.f32.mrf.mxu0
    %v790 = vadd.f32 0.0, %v789
    %v791 = vpop.f32.mrf.mxu0
    %792 = vdwg.mxu0
    %v793 = vmul.f32 %v790, %v632
    %v810 = vunpack.c.l.b16 %v652
    %v811 = vunpack.c.l.b16 %v653
    %v812 = vunpack.c.l.b16 %v654
    %v813 = vunpack.c.l.b16 %v655
    %v814 = vunpack.c.l.b16 %v656
    %v815 = vunpack.c.l.b16 %v657
    %v816 = vunpack.c.l.b16 %v658
    %v817 = vunpack.c.l.b16 %v659
    %v818 = vunpack.c.l.b16 %v660
    %v819 = vunpack.c.l.b16 %v661
    %v820 = vunpack.c.l.b16 %v662
    %v821 = vunpack.c.l.b16 %v663
    %v822 = vunpack.c.l.b16 %v664
    %v823 = vunpack.c.l.b16 %v665
    %v824 = vunpack.c.l.b16 %v666
    %v825 = vunpack.c.l.b16 %v667
    %v826 = vpack.c.b16 %v811, %v810
    %v827 = vpack.c.b16 %v813, %v812
    %v828 = vpack.c.b16 %v815, %v814
    %v829 = vpack.c.b16 %v817, %v816
    %v830 = vpack.c.b16 %v819, %v818
    %v831 = vpack.c.b16 %v821, %v820
    %v832 = vpack.c.b16 %v823, %v822
    %v833 = vpack.c.b16 %v825, %v824
    %842 = vmatpush.bf16.msra.mxu0 %v833
    %843 = vmatpush.bf16.msra.mxu0 %v832
    %844 = vmatpush.bf16.msra.mxu0 %v831
    %845 = vmatpush.bf16.msra.mxu0 %v830
    %846 = vmatpush.bf16.msra.mxu0 %v829
    %847 = vmatpush.bf16.msra.mxu0 %v828
    %848 = vmatpush.bf16.msra.mxu0 %v827
    %849 = vmatpush.bf16.msra.mxu0 %v826
    %850 = vmatmul.bf16.gmra.mxu0 %v635
    %v851 = vpop.f32.mrf.mxu0
    %v852 = vadd.f32 0.0, %v851
    %v853 = vpop.f32.mrf.mxu0
    %854 = vdwg.mxu0
    %v855 = vpack.c.bf16 %v852, %v852
    %vm856 = vcmask 64512
    %v858 = vsel %vm856, %v620, 0
    %vm860 = vcmask 1043456
    %v862 = vsel %vm860, %v855, 0
    %864 = vmatpush.bf16.msra.mxu0 0
    %865 = vmatpush.bf16.msra.mxu0 0
    %866 = vmatpush.bf16.msra.mxu0 0
    %867 = vmatpush.bf16.msra.mxu0 0
    %868 = vmatpush.bf16.msra.mxu0 0
    %869 = vmatpush.bf16.msra.mxu0 0
    %870 = vmatpush.bf16.msra.mxu0 0
    %871 = vmatpush.bf16.msra.mxu0 %v862
    %872 = vmatmul.bf16.gmra.mxu0 %v858
    %v873 = vpop.f32.mrf.mxu0
    %v874 = vadd.f32 0.0, %v873
    %v875 = vpop.f32.mrf.mxu0
    %v876 = vadd.f32 0.0, %v875
    %877 = vdwg.mxu0
    %v894 = vunpack.c.l.b16 %v668
    %v895 = vunpack.c.l.b16 %v669
    %v896 = vunpack.c.l.b16 %v670
    %v897 = vunpack.c.l.b16 %v671
    %v898 = vunpack.c.l.b16 %v672
    %v899 = vunpack.c.l.b16 %v673
    %v900 = vunpack.c.l.b16 %v674
    %v901 = vunpack.c.l.b16 %v675
    %v902 = vunpack.c.l.b16 %v676
    %v903 = vunpack.c.l.b16 %v677
    %v904 = vunpack.c.l.b16 %v678
    %v905 = vunpack.c.l.b16 %v679
    %v906 = vunpack.c.l.b16 %v680
    %v907 = vunpack.c.l.b16 %v681
    %v908 = vunpack.c.l.b16 %v682
    %v909 = vunpack.c.l.b16 %v683
    %v910 = vpack.c.b16 %v895, %v894
    %v911 = vpack.c.b16 %v897, %v896
    %v912 = vpack.c.b16 %v899, %v898
    %v913 = vpack.c.b16 %v901, %v900
    %v914 = vpack.c.b16 %v903, %v902
    %v915 = vpack.c.b16 %v905, %v904
    %v916 = vpack.c.b16 %v907, %v906
    %v917 = vpack.c.b16 %v909, %v908
    %926 = vmatpush.bf16.msra.mxu0 %v917
    %927 = vmatpush.bf16.msra.mxu0 %v916
    %928 = vmatpush.bf16.msra.mxu0 %v915
    %929 = vmatpush.bf16.msra.mxu0 %v914
    %930 = vmatpush.bf16.msra.mxu0 %v913
    %931 = vmatpush.bf16.msra.mxu0 %v912
    %932 = vmatpush.bf16.msra.mxu0 %v911
    %933 = vmatpush.bf16.msra.mxu0 %v910
    %934 = vmatmul.bf16.gmra.mxu0 %v604
    %v935 = vpop.f32.mrf.mxu0
    %v936 = vadd.f32 0.0, %v935
    %v937 = vpop.f32.mrf.mxu0
    %v938 = vadd.f32 0.0, %v937
    %939 = vdwg.mxu0
    %v940 = vxor.u32 %v936, 2147483648
    %v941 = vxor.u32 %v938, 2147483648
    %v942 = vmul.f32 %v940, 1.442695
    %v943 = vpow.pop %v942
    %v944 = vmul.f32 %v941, 1.442695
    %v945 = vpow.pop %v944
    %v946 = vadd.f32 %v943, 1.0
    %v947 = vadd.f32 %v945, 1.0
    %v948 = vrcp.pop %v946
    %v949 = vmul.f32 %v946, %v948
    %v950 = vsub.f32 1.0, %v949
    %v951 = vmul.f32 %v948, %v950
    %v952 = vadd.f32 %v948, %v951
    %vm953 = vweird.f32 %v946
    %vm954 = vweird.f32 %v948
    %vm955 = vmor %vm953, %vm954
    %v956 = vsel %vm955, %v948, %v952
    %v957 = vand.u32 2147483647, %v946
    %vm958 = vcmp.eq.f32.partialorder %v957, 8.507059e+37
    %v959 = vand.u32 %v946, 2147483648
    %v960 = vor.u32 1.1754944e-38, %v959
    %v961 = vsel %vm958, %v960, %v956
    %v962 = vmul.f32 1.0, %v961
    %v963 = vrcp.pop %v947
    %v964 = vmul.f32 %v947, %v963
    %v965 = vsub.f32 1.0, %v964
    %v966 = vmul.f32 %v963, %v965
    %v967 = vadd.f32 %v963, %v966
    %vm968 = vweird.f32 %v947
    %vm969 = vweird.f32 %v963
    %vm970 = vmor %vm968, %vm969
    %v971 = vsel %vm970, %v963, %v967
    %v972 = vand.u32 2147483647, %v947
    %vm973 = vcmp.eq.f32.partialorder %v972, 8.507059e+37
    %v974 = vand.u32 %v947, 2147483648
    %v975 = vor.u32 1.1754944e-38, %v974
    %v976 = vsel %vm973, %v975, %v971
    %v977 = vmul.f32 1.0, %v976
    %v978 = vmul.f32 %v936, %v962
    %v979 = vmul.f32 %v938, %v977
    %v980 = vpack.c.bf16 %v979, %v978
    %v1013 = vunpack.c.l.b16 %v684
    %v1014 = vunpack.c.h.b16 %v684
    %v1015 = vunpack.c.l.b16 %v685
    %v1016 = vunpack.c.h.b16 %v685
    %v1017 = vunpack.c.l.b16 %v686
    %v1018 = vunpack.c.h.b16 %v686
    %v1019 = vunpack.c.l.b16 %v687
    %v1020 = vunpack.c.h.b16 %v687
    %v1021 = vunpack.c.l.b16 %v688
    %v1022 = vunpack.c.h.b16 %v688
    %v1023 = vunpack.c.l.b16 %v689
    %v1024 = vunpack.c.h.b16 %v689
    %v1025 = vunpack.c.l.b16 %v690
    %v1026 = vunpack.c.h.b16 %v690
    %v1027 = vunpack.c.l.b16 %v691
    %v1028 = vunpack.c.h.b16 %v691
    %v1029 = vunpack.c.l.b16 %v692
    %v1030 = vunpack.c.h.b16 %v692
    %v1031 = vunpack.c.l.b16 %v693
    %v1032 = vunpack.c.h.b16 %v693
    %v1033 = vunpack.c.l.b16 %v694
    %v1034 = vunpack.c.h.b16 %v694
    %v1035 = vunpack.c.l.b16 %v695
    %v1036 = vunpack.c.h.b16 %v695
    %v1037 = vunpack.c.l.b16 %v696
    %v1038 = vunpack.c.h.b16 %v696
    %v1039 = vunpack.c.l.b16 %v697
    %v1040 = vunpack.c.h.b16 %v697
    %v1041 = vunpack.c.l.b16 %v698
    %v1042 = vunpack.c.h.b16 %v698
    %v1043 = vunpack.c.l.b16 %v699
    %v1044 = vunpack.c.h.b16 %v699
    %v1045 = vunpack.c.l.b16 %v700
    %v1046 = vunpack.c.h.b16 %v700
    %v1047 = vunpack.c.l.b16 %v701
    %v1048 = vunpack.c.h.b16 %v701
    %v1049 = vunpack.c.l.b16 %v702
    %v1050 = vunpack.c.h.b16 %v702
    %v1051 = vunpack.c.l.b16 %v703
    %v1052 = vunpack.c.h.b16 %v703
    %v1053 = vunpack.c.l.b16 %v704
    %v1054 = vunpack.c.h.b16 %v704
    %v1055 = vunpack.c.l.b16 %v705
    %v1056 = vunpack.c.h.b16 %v705
    %v1057 = vunpack.c.l.b16 %v706
    %v1058 = vunpack.c.h.b16 %v706
    %v1059 = vunpack.c.l.b16 %v707
    %v1060 = vunpack.c.h.b16 %v707
    %v1061 = vunpack.c.l.b16 %v708
    %v1062 = vunpack.c.h.b16 %v708
    %v1063 = vunpack.c.l.b16 %v709
    %v1064 = vunpack.c.h.b16 %v709
    %v1065 = vunpack.c.l.b16 %v710
    %v1066 = vunpack.c.h.b16 %v710
    %v1067 = vunpack.c.l.b16 %v711
    %v1068 = vunpack.c.h.b16 %v711
    %v1069 = vunpack.c.l.b16 %v712
    %v1070 = vunpack.c.h.b16 %v712
    %v1071 = vunpack.c.l.b16 %v713
    %v1072 = vunpack.c.h.b16 %v713
    %v1073 = vunpack.c.l.b16 %v714
    %v1074 = vunpack.c.h.b16 %v714
    %v1075 = vunpack.c.l.b16 %v715
    %v1076 = vunpack.c.h.b16 %v715
    %v1077 = vpack.c.b16 %v1017, %v1013
    %v1078 = vpack.c.b16 %v1018, %v1014
    %v1079 = vpack.c.b16 %v1019, %v1015
    %v1080 = vpack.c.b16 %v1020, %v1016
    %v1081 = vpack.c.b16 %v1025, %v1021
    %v1082 = vpack.c.b16 %v1026, %v1022
    %v1083 = vpack.c.b16 %v1027, %v1023
    %v1084 = vpack.c.b16 %v1028, %v1024
    %v1085 = vpack.c.b16 %v1033, %v1029
    %v1086 = vpack.c.b16 %v1034, %v1030
    %v1087 = vpack.c.b16 %v1035, %v1031
    %v1088 = vpack.c.b16 %v1036, %v1032
    %v1089 = vpack.c.b16 %v1041, %v1037
    %v1090 = vpack.c.b16 %v1042, %v1038
    %v1091 = vpack.c.b16 %v1043, %v1039
    %v1092 = vpack.c.b16 %v1044, %v1040
    %v1093 = vpack.c.b16 %v1049, %v1045
    %v1094 = vpack.c.b16 %v1050, %v1046
    %v1095 = vpack.c.b16 %v1051, %v1047
    %v1096 = vpack.c.b16 %v1052, %v1048
    %v1097 = vpack.c.b16 %v1057, %v1053
    %v1098 = vpack.c.b16 %v1058, %v1054
    %v1099 = vpack.c.b16 %v1059, %v1055
    %v1100 = vpack.c.b16 %v1060, %v1056
    %v1101 = vpack.c.b16 %v1065, %v1061
    %v1102 = vpack.c.b16 %v1066, %v1062
    %v1103 = vpack.c.b16 %v1067, %v1063
    %v1104 = vpack.c.b16 %v1068, %v1064
    %v1105 = vpack.c.b16 %v1073, %v1069
    %v1106 = vpack.c.b16 %v1074, %v1070
    %v1107 = vpack.c.b16 %v1075, %v1071
    %v1108 = vpack.c.b16 %v1076, %v1072
    %1141 = vmatpush.bf16.msra.mxu0 %v1105
    %1142 = vmatpush.bf16.msra.mxu0 %v1101
    %1143 = vmatpush.bf16.msra.mxu0 %v1097
    %1144 = vmatpush.bf16.msra.mxu0 %v1093
    %1145 = vmatpush.bf16.msra.mxu0 %v1089
    %1146 = vmatpush.bf16.msra.mxu0 %v1085
    %1147 = vmatpush.bf16.msra.mxu0 %v1081
    %1148 = vmatpush.bf16.msra.mxu0 %v1077
    %1149 = vmatmul.bf16.gmra.mxu0 %v980
    %v1150 = vpop.f32.mrf.mxu0
    %v1151 = vadd.f32 0.0, %v1150
    %v1152 = vpop.f32.mrf.mxu0
    %v1153 = vadd.f32 0.0, %v1152
    %1154 = vdwg.mxu0
    %1155 = vmatpush.bf16.msra.mxu0 %v1106
    %1156 = vmatpush.bf16.msra.mxu0 %v1102
    %1157 = vmatpush.bf16.msra.mxu0 %v1098
    %1158 = vmatpush.bf16.msra.mxu0 %v1094
    %1159 = vmatpush.bf16.msra.mxu0 %v1090
    %1160 = vmatpush.bf16.msra.mxu0 %v1086
    %1161 = vmatpush.bf16.msra.mxu0 %v1082
    %1162 = vmatpush.bf16.msra.mxu0 %v1078
    %1163 = vmatmul.bf16.gmra.mxu0 %v980
    %v1164 = vpop.f32.mrf.mxu0
    %v1165 = vadd.f32 0.0, %v1164
    %v1166 = vpop.f32.mrf.mxu0
    %v1167 = vadd.f32 0.0, %v1166
    %1168 = vdwg.mxu0
    %1169 = vmatpush.bf16.msra.mxu0 %v1107
    %1170 = vmatpush.bf16.msra.mxu0 %v1103
    %1171 = vmatpush.bf16.msra.mxu0 %v1099
    %1172 = vmatpush.bf16.msra.mxu0 %v1095
    %1173 = vmatpush.bf16.msra.mxu0 %v1091
    %1174 = vmatpush.bf16.msra.mxu0 %v1087
    %1175 = vmatpush.bf16.msra.mxu0 %v1083
    %1176 = vmatpush.bf16.msra.mxu0 %v1079
    %1177 = vmatmul.bf16.gmra.mxu0 %v980
    %v1178 = vpop.f32.mrf.mxu0
    %v1179 = vadd.f32 0.0, %v1178
    %v1180 = vpop.f32.mrf.mxu0
    %v1181 = vadd.f32 0.0, %v1180
    %1182 = vdwg.mxu0
    %1183 = vmatpush.bf16.msra.mxu0 %v1108
    %1184 = vmatpush.bf16.msra.mxu0 %v1104
    %1185 = vmatpush.bf16.msra.mxu0 %v1100
    %1186 = vmatpush.bf16.msra.mxu0 %v1096
    %1187 = vmatpush.bf16.msra.mxu0 %v1092
    %1188 = vmatpush.bf16.msra.mxu0 %v1088
    %1189 = vmatpush.bf16.msra.mxu0 %v1084
    %1190 = vmatpush.bf16.msra.mxu0 %v1080
    %1191 = vmatmul.bf16.gmra.mxu0 %v980
    %v1192 = vpop.f32.mrf.mxu0
    %v1193 = vadd.f32 0.0, %v1192
    %v1194 = vpop.f32.mrf.mxu0
    %v1195 = vadd.f32 0.0, %v1194
    %1196 = vdwg.mxu0
    %v1197 = vmul.f32 %v517, %v1151
    %v1198 = vmul.f32 %v537, %v1165
    %v1199 = vmul.f32 %v557, %v1179
    %v1200 = vmul.f32 %v569, %v1193
    %v1201 = vmul.f32 %v522, %v1153
    %v1202 = vmul.f32 %v542, %v1167
    %v1203 = vmul.f32 %v562, %v1181
    %v1204 = vmul.f32 %v574, %v1195
    %v1205 = vadd.f32 %v1197, %v1198
    %v1206 = vadd.f32 %v1201, %v1202
    %v1207 = vadd.f32 %v1205, %v1199
    %v1208 = vadd.f32 %v1206, %v1203
    %v1209 = vadd.f32 %v1207, %v1200
    %v1210 = vadd.f32 %v1208, %v1204
    %v1211 = vmul.f32 %v874, %v1209
    %v1212 = vmul.f32 %v876, %v1210
    %v1213 = vpack.c.bf16 %v1212, %v1211
    %vm1214 = vcmask 130048
    %v1216 = vsel %vm1214, %v627, 0
    %1218 = vmatpush.bf16.msra.mxu0 0
    %1219 = vmatpush.bf16.msra.mxu0 0
    %1220 = vmatpush.bf16.msra.mxu0 0
    %1221 = vmatpush.bf16.msra.mxu0 0
    %1222 = vmatpush.bf16.msra.mxu0 0
    %1223 = vmatpush.bf16.msra.mxu0 0
    %1224 = vmatpush.bf16.msra.mxu0 0
    %1225 = vmatpush.bf16.msra.mxu0 %v1213
    %1226 = vmatmul.bf16.gmra.mxu0 %v1216
    %v1227 = vpop.f32.mrf.mxu0
    %v1228 = vadd.f32 0.0, %v1227
    %v1229 = vpop.f32.mrf.mxu0
    %1230 = vdwg.mxu0
    %v1231 = vmul.f32 %v1228, 0.70710677
    %v1232 = vpack.c.bf16 %v1231, %v1231
    %v1249 = vunpack.c.l.b16 %v716
    %v1250 = vunpack.c.l.b16 %v717
    %v1251 = vunpack.c.l.b16 %v718
    %v1252 = vunpack.c.l.b16 %v719
    %v1253 = vunpack.c.l.b16 %v720
    %v1254 = vunpack.c.l.b16 %v721
    %v1255 = vunpack.c.l.b16 %v722
    %v1256 = vunpack.c.l.b16 %v723
    %v1257 = vunpack.c.l.b16 %v724
    %v1258 = vunpack.c.l.b16 %v725
    %v1259 = vunpack.c.l.b16 %v726
    %v1260 = vunpack.c.l.b16 %v727
    %v1261 = vunpack.c.l.b16 %v728
    %v1262 = vunpack.c.l.b16 %v729
    %v1263 = vunpack.c.l.b16 %v730
    %v1264 = vunpack.c.l.b16 %v731
    %v1265 = vpack.c.b16 %v1250, %v1249
    %v1266 = vpack.c.b16 %v1252, %v1251
    %v1267 = vpack.c.b16 %v1254, %v1253
    %v1268 = vpack.c.b16 %v1256, %v1255
    %v1269 = vpack.c.b16 %v1258, %v1257
    %v1270 = vpack.c.b16 %v1260, %v1259
    %v1271 = vpack.c.b16 %v1262, %v1261
    %v1272 = vpack.c.b16 %v1264, %v1263
    %1281 = vmatpush.bf16.msra.mxu0 %v1272
    %1282 = vmatpush.bf16.msra.mxu0 %v1271
    %1283 = vmatpush.bf16.msra.mxu0 %v1270
    %1284 = vmatpush.bf16.msra.mxu0 %v1269
    %1285 = vmatpush.bf16.msra.mxu0 %v1268
    %1286 = vmatpush.bf16.msra.mxu0 %v1267
    %1287 = vmatpush.bf16.msra.mxu0 %v1266
    %1288 = vmatpush.bf16.msra.mxu0 %v1265
    %1289 = vmatmul.bf16.gmra.mxu0 %v1232
    %v1290 = vpop.f32.mrf.mxu0
    %v1291 = vadd.f32 0.0, %v1290
    %v1292 = vpop.f32.mrf.mxu0
    %1293 = vdwg.mxu0
    %v1294 = vadd.f32 %v793, %v1291
    %v1295 = vxor.u32 %v1294, 2147483648
    %v1296 = vmul.f32 %v1295, 1.442695
    %v1297 = vpow.pop %v1296
    %v1298 = vadd.f32 %v1297, 1.0
    %v1299 = vrcp.pop %v1298
    %v1300 = vmul.f32 %v1298, %v1299
    %v1301 = vsub.f32 1.0, %v1300
    %v1302 = vmul.f32 %v1299, %v1301
    %v1303 = vadd.f32 %v1299, %v1302
    %vm1304 = vweird.f32 %v1298
    %vm1305 = vweird.f32 %v1299
    %vm1306 = vmor %vm1304, %vm1305
    %v1307 = vsel %vm1306, %v1299, %v1303
    %v1308 = vand.u32 2147483647, %v1298
    %vm1309 = vcmp.eq.f32.partialorder %v1308, 8.507059e+37
    %v1310 = vand.u32 %v1298, 2147483648
    %v1311 = vor.u32 1.1754944e-38, %v1310
    %v1312 = vsel %vm1309, %v1311, %v1307
    %v1313 = vmul.f32 1.0, %v1312
    %1314 = vrot.lane.b32.xlu0 %v1294, 112
    %v1315 = vpop.permute.xlu0 %1314
    %v1316 = vmul.f32 %v1315, %v1313
    %vm1317 = vcmp.lt.s32.totalorder %v577, 16
    %v1318 = vmul.f32 %v1294, %v1313
    %vm1319 = vcmp.lt.s32.totalorder %v577, 32
    %v1320 = vsel %vm1319, %v1316, 0.0
    %v1321 = vsel %vm1317, %v1318, %v1320
    %v1322 = vpack.c.bf16 %v1321, %v1321
    %s1323 = scalar_lea.vmem [#allocation2], 64
    %v1324 = vld [vmem:[%s1323] sm:$0xf]
    %v1325 = vld [vmem:[%s1323 + $0x4] sm:$0xf]
    %v1326 = vld [vmem:[%s1323 + $0x8] sm:$0xf]
    %v1327 = vld [vmem:[%s1323 + $0xc] sm:$0xf]
    %v1328 = vld [vmem:[%s1323 + $0x10] sm:$0xf]
    %v1329 = vld [vmem:[%s1323 + $0x14] sm:$0xf]
    %v1330 = vld [vmem:[%s1323 + $0x18] sm:$0xf]
    %v1331 = vld [vmem:[%s1323 + $0x1c] sm:$0xf]
    %v1332 = vld [vmem:[%s1323 + $0x20] sm:$0xf]
    %v1333 = vld [vmem:[%s1323 + $0x24] sm:$0xf]
    %v1334 = vld [vmem:[%s1323 + $0x28] sm:$0xf]
    %v1335 = vld [vmem:[%s1323 + $0x2c] sm:$0xf]
    %v1336 = vld [vmem:[%s1323 + $0x30] sm:$0xf]
    %v1337 = vld [vmem:[%s1323 + $0x34] sm:$0xf]
    %v1338 = vld [vmem:[%s1323 + $0x38] sm:$0xf]
    %v1339 = vld [vmem:[%s1323 + $0x3c] sm:$0xf]
    %s1340 = scalar_lea.vmem [#allocation5], 64
    %v1341 = vld [vmem:[%s1340] sm:$0xf]
    %v1342 = vld [vmem:[%s1340 + $0x4] sm:$0xf]
    %v1343 = vld [vmem:[%s1340 + $0x8] sm:$0xf]
    %v1344 = vld [vmem:[%s1340 + $0xc] sm:$0xf]
    %v1345 = vld [vmem:[%s1340 + $0x10] sm:$0xf]
    %v1346 = vld [vmem:[%s1340 + $0x14] sm:$0xf]
    %v1347 = vld [vmem:[%s1340 + $0x18] sm:$0xf]
    %v1348 = vld [vmem:[%s1340 + $0x1c] sm:$0xf]
    %v1349 = vld [vmem:[%s1340 + $0x20] sm:$0xf]
    %v1350 = vld [vmem:[%s1340 + $0x24] sm:$0xf]
    %v1351 = vld [vmem:[%s1340 + $0x28] sm:$0xf]
    %v1352 = vld [vmem:[%s1340 + $0x2c] sm:$0xf]
    %v1353 = vld [vmem:[%s1340 + $0x30] sm:$0xf]
    %v1354 = vld [vmem:[%s1340 + $0x34] sm:$0xf]
    %v1355 = vld [vmem:[%s1340 + $0x38] sm:$0xf]
    %v1356 = vld [vmem:[%s1340 + $0x3c] sm:$0xf]
    %s1357 = scalar_lea.vmem [#allocation7], 64
    %v1358 = vld [vmem:[%s1357] sm:$0xf]
    %v1359 = vld [vmem:[%s1357 + $0x4] sm:$0xf]
    %v1360 = vld [vmem:[%s1357 + $0x8] sm:$0xf]
    %v1361 = vld [vmem:[%s1357 + $0xc] sm:$0xf]
    %v1362 = vld [vmem:[%s1357 + $0x10] sm:$0xf]
    %v1363 = vld [vmem:[%s1357 + $0x14] sm:$0xf]
    %v1364 = vld [vmem:[%s1357 + $0x18] sm:$0xf]
    %v1365 = vld [vmem:[%s1357 + $0x1c] sm:$0xf]
    %v1366 = vld [vmem:[%s1357 + $0x20] sm:$0xf]
    %v1367 = vld [vmem:[%s1357 + $0x24] sm:$0xf]
    %v1368 = vld [vmem:[%s1357 + $0x28] sm:$0xf]
    %v1369 = vld [vmem:[%s1357 + $0x2c] sm:$0xf]
    %v1370 = vld [vmem:[%s1357 + $0x30] sm:$0xf]
    %v1371 = vld [vmem:[%s1357 + $0x34] sm:$0xf]
    %v1372 = vld [vmem:[%s1357 + $0x38] sm:$0xf]
    %v1373 = vld [vmem:[%s1357 + $0x3c] sm:$0xf]
    %s1374 = scalar_lea.vmem [#allocation8], 256
    %v1375 = vld [vmem:[%s1374] sm:$0xff]
    %v1376 = vld [vmem:[%s1374 + $0x8] sm:$0xff]
    %v1377 = vld [vmem:[%s1374 + $0x10] sm:$0xff]
    %v1378 = vld [vmem:[%s1374 + $0x18] sm:$0xff]
    %v1379 = vld [vmem:[%s1374 + $0x20] sm:$0xff]
    %v1380 = vld [vmem:[%s1374 + $0x28] sm:$0xff]
    %v1381 = vld [vmem:[%s1374 + $0x30] sm:$0xff]
    %v1382 = vld [vmem:[%s1374 + $0x38] sm:$0xff]
    %v1383 = vld [vmem:[%s1374 + $0x40] sm:$0xff]
    %v1384 = vld [vmem:[%s1374 + $0x48] sm:$0xff]
    %v1385 = vld [vmem:[%s1374 + $0x50] sm:$0xff]
    %v1386 = vld [vmem:[%s1374 + $0x58] sm:$0xff]
    %v1387 = vld [vmem:[%s1374 + $0x60] sm:$0xff]
    %v1388 = vld [vmem:[%s1374 + $0x68] sm:$0xff]
    %v1389 = vld [vmem:[%s1374 + $0x70] sm:$0xff]
    %v1390 = vld [vmem:[%s1374 + $0x78] sm:$0xff]
    %v1391 = vld [vmem:[%s1374 + $0x80] sm:$0xff]
    %v1392 = vld [vmem:[%s1374 + $0x88] sm:$0xff]
    %v1393 = vld [vmem:[%s1374 + $0x90] sm:$0xff]
    %v1394 = vld [vmem:[%s1374 + $0x98] sm:$0xff]
    %v1395 = vld [vmem:[%s1374 + $0xa0] sm:$0xff]
    %v1396 = vld [vmem:[%s1374 + $0xa8] sm:$0xff]
    %v1397 = vld [vmem:[%s1374 + $0xb0] sm:$0xff]
    %v1398 = vld [vmem:[%s1374 + $0xb8] sm:$0xff]
    %v1399 = vld [vmem:[%s1374 + $0xc0] sm:$0xff]
    %v1400 = vld [vmem:[%s1374 + $0xc8] sm:$0xff]
    %v1401 = vld [vmem:[%s1374 + $0xd0] sm:$0xff]
    %v1402 = vld [vmem:[%s1374 + $0xd8] sm:$0xff]
    %v1403 = vld [vmem:[%s1374 + $0xe0] sm:$0xff]
    %v1404 = vld [vmem:[%s1374 + $0xe8] sm:$0xff]
    %v1405 = vld [vmem:[%s1374 + $0xf0] sm:$0xff]
    %v1406 = vld [vmem:[%s1374 + $0xf8] sm:$0xff]
    %s1407 = scalar_lea.vmem [#allocation10], 64
    %v1408 = vld [vmem:[%s1407] sm:$0xf]
    %v1409 = vld [vmem:[%s1407 + $0x4] sm:$0xf]
    %v1410 = vld [vmem:[%s1407 + $0x8] sm:$0xf]
    %v1411 = vld [vmem:[%s1407 + $0xc] sm:$0xf]
    %v1412 = vld [vmem:[%s1407 + $0x10] sm:$0xf]
    %v1413 = vld [vmem:[%s1407 + $0x14] sm:$0xf]
    %v1414 = vld [vmem:[%s1407 + $0x18] sm:$0xf]
    %v1415 = vld [vmem:[%s1407 + $0x1c] sm:$0xf]
    %v1416 = vld [vmem:[%s1407 + $0x20] sm:$0xf]
    %v1417 = vld [vmem:[%s1407 + $0x24] sm:$0xf]
    %v1418 = vld [vmem:[%s1407 + $0x28] sm:$0xf]
    %v1419 = vld [vmem:[%s1407 + $0x2c] sm:$0xf]
    %v1420 = vld [vmem:[%s1407 + $0x30] sm:$0xf]
    %v1421 = vld [vmem:[%s1407 + $0x34] sm:$0xf]
    %v1422 = vld [vmem:[%s1407 + $0x38] sm:$0xf]
    %v1423 = vld [vmem:[%s1407 + $0x3c] sm:$0xf]
    %v1440 = vunpack.c.l.b16 %v1324
    %v1441 = vunpack.c.l.b16 %v1325
    %v1442 = vunpack.c.l.b16 %v1326
    %v1443 = vunpack.c.l.b16 %v1327
    %v1444 = vunpack.c.l.b16 %v1328
    %v1445 = vunpack.c.l.b16 %v1329
    %v1446 = vunpack.c.l.b16 %v1330
    %v1447 = vunpack.c.l.b16 %v1331
    %v1448 = vunpack.c.l.b16 %v1332
    %v1449 = vunpack.c.l.b16 %v1333
    %v1450 = vunpack.c.l.b16 %v1334
    %v1451 = vunpack.c.l.b16 %v1335
    %v1452 = vunpack.c.l.b16 %v1336
    %v1453 = vunpack.c.l.b16 %v1337
    %v1454 = vunpack.c.l.b16 %v1338
    %v1455 = vunpack.c.l.b16 %v1339
    %v1456 = vpack.c.b16 %v1441, %v1440
    %v1457 = vpack.c.b16 %v1443, %v1442
    %v1458 = vpack.c.b16 %v1445, %v1444
    %v1459 = vpack.c.b16 %v1447, %v1446
    %v1460 = vpack.c.b16 %v1449, %v1448
    %v1461 = vpack.c.b16 %v1451, %v1450
    %v1462 = vpack.c.b16 %v1453, %v1452
    %v1463 = vpack.c.b16 %v1455, %v1454
    %1472 = vmatpush.bf16.msra.mxu0 %v1463
    %1473 = vmatpush.bf16.msra.mxu0 %v1462
    %1474 = vmatpush.bf16.msra.mxu0 %v1461
    %1475 = vmatpush.bf16.msra.mxu0 %v1460
    %1476 = vmatpush.bf16.msra.mxu0 %v1459
    %1477 = vmatpush.bf16.msra.mxu0 %v1458
    %1478 = vmatpush.bf16.msra.mxu0 %v1457
    %1479 = vmatpush.bf16.msra.mxu0 %v1456
    %1480 = vmatmul.bf16.gmra.mxu0 %v1322
    %v1481 = vpop.f32.mrf.mxu0
    %v1482 = vadd.f32 0.0, %v1481
    %v1483 = vpop.f32.mrf.mxu0
    %1484 = vdwg.mxu0
    %v1485 = vmul.f32 %v1482, %v632
    %v1502 = vunpack.c.l.b16 %v1341
    %v1503 = vunpack.c.l.b16 %v1342
    %v1504 = vunpack.c.l.b16 %v1343
    %v1505 = vunpack.c.l.b16 %v1344
    %v1506 = vunpack.c.l.b16 %v1345
    %v1507 = vunpack.c.l.b16 %v1346
    %v1508 = vunpack.c.l.b16 %v1347
    %v1509 = vunpack.c.l.b16 %v1348
    %v1510 = vunpack.c.l.b16 %v1349
    %v1511 = vunpack.c.l.b16 %v1350
    %v1512 = vunpack.c.l.b16 %v1351
    %v1513 = vunpack.c.l.b16 %v1352
    %v1514 = vunpack.c.l.b16 %v1353
    %v1515 = vunpack.c.l.b16 %v1354
    %v1516 = vunpack.c.l.b16 %v1355
    %v1517 = vunpack.c.l.b16 %v1356
    %v1518 = vpack.c.b16 %v1503, %v1502
    %v1519 = vpack.c.b16 %v1505, %v1504
    %v1520 = vpack.c.b16 %v1507, %v1506
    %v1521 = vpack.c.b16 %v1509, %v1508
    %v1522 = vpack.c.b16 %v1511, %v1510
    %v1523 = vpack.c.b16 %v1513, %v1512
    %v1524 = vpack.c.b16 %v1515, %v1514
    %v1525 = vpack.c.b16 %v1517, %v1516
    %1534 = vmatpush.bf16.msra.mxu0 %v1525
    %1535 = vmatpush.bf16.msra.mxu0 %v1524
    %1536 = vmatpush.bf16.msra.mxu0 %v1523
    %1537 = vmatpush.bf16.msra.mxu0 %v1522
    %1538 = vmatpush.bf16.msra.mxu0 %v1521
    %1539 = vmatpush.bf16.msra.mxu0 %v1520
    %1540 = vmatpush.bf16.msra.mxu0 %v1519
    %1541 = vmatpush.bf16.msra.mxu0 %v1518
    %1542 = vmatmul.bf16.gmra.mxu0 %v1322
    %v1543 = vpop.f32.mrf.mxu0
    %v1544 = vadd.f32 0.0, %v1543
    %v1545 = vpop.f32.mrf.mxu0
    %1546 = vdwg.mxu0
    %v1547 = vpack.c.bf16 %v1544, %v1544
    %v1549 = vsel %vm860, %v1547, 0
    %1551 = vmatpush.bf16.msra.mxu0 0
    %1552 = vmatpush.bf16.msra.mxu0 0
    %1553 = vmatpush.bf16.msra.mxu0 0
    %1554 = vmatpush.bf16.msra.mxu0 0
    %1555 = vmatpush.bf16.msra.mxu0 0
    %1556 = vmatpush.bf16.msra.mxu0 0
    %1557 = vmatpush.bf16.msra.mxu0 0
    %1558 = vmatpush.bf16.msra.mxu0 %v1549
    %1559 = vmatmul.bf16.gmra.mxu0 %v858
    %v1560 = vpop.f32.mrf.mxu0
    %v1561 = vadd.f32 0.0, %v1560
    %v1562 = vpop.f32.mrf.mxu0
    %v1563 = vadd.f32 0.0, %v1562
    %1564 = vdwg.mxu0
    %v1581 = vunpack.c.l.b16 %v1358
    %v1582 = vunpack.c.l.b16 %v1359
    %v1583 = vunpack.c.l.b16 %v1360
    %v1584 = vunpack.c.l.b16 %v1361
    %v1585 = vunpack.c.l.b16 %v1362
    %v1586 = vunpack.c.l.b16 %v1363
    %v1587 = vunpack.c.l.b16 %v1364
    %v1588 = vunpack.c.l.b16 %v1365
    %v1589 = vunpack.c.l.b16 %v1366
    %v1590 = vunpack.c.l.b16 %v1367
    %v1591 = vunpack.c.l.b16 %v1368
    %v1592 = vunpack.c.l.b16 %v1369
    %v1593 = vunpack.c.l.b16 %v1370
    %v1594 = vunpack.c.l.b16 %v1371
    %v1595 = vunpack.c.l.b16 %v1372
    %v1596 = vunpack.c.l.b16 %v1373
    %v1597 = vpack.c.b16 %v1582, %v1581
    %v1598 = vpack.c.b16 %v1584, %v1583
    %v1599 = vpack.c.b16 %v1586, %v1585
    %v1600 = vpack.c.b16 %v1588, %v1587
    %v1601 = vpack.c.b16 %v1590, %v1589
    %v1602 = vpack.c.b16 %v1592, %v1591
    %v1603 = vpack.c.b16 %v1594, %v1593
    %v1604 = vpack.c.b16 %v1596, %v1595
    %1613 = vmatpush.bf16.msra.mxu0 %v1604
    %1614 = vmatpush.bf16.msra.mxu0 %v1603
    %1615 = vmatpush.bf16.msra.mxu0 %v1602
    %1616 = vmatpush.bf16.msra.mxu0 %v1601
    %1617 = vmatpush.bf16.msra.mxu0 %v1600
    %1618 = vmatpush.bf16.msra.mxu0 %v1599
    %1619 = vmatpush.bf16.msra.mxu0 %v1598
    %1620 = vmatpush.bf16.msra.mxu0 %v1597
    %1621 = vmatmul.bf16.gmra.mxu0 %v604
    %v1622 = vpop.f32.mrf.mxu0
    %v1623 = vadd.f32 0.0, %v1622
    %v1624 = vpop.f32.mrf.mxu0
    %v1625 = vadd.f32 0.0, %v1624
    %1626 = vdwg.mxu0
    %v1627 = vxor.u32 %v1623, 2147483648
    %v1628 = vxor.u32 %v1625, 2147483648
    %v1629 = vmul.f32 %v1627, 1.442695
    %v1630 = vpow.pop %v1629
    %v1631 = vmul.f32 %v1628, 1.442695
    %v1632 = vpow.pop %v1631
    %v1633 = vadd.f32 %v1630, 1.0
    %v1634 = vadd.f32 %v1632, 1.0
    %v1635 = vrcp.pop %v1633
    %v1636 = vmul.f32 %v1633, %v1635
    %v1637 = vsub.f32 1.0, %v1636
    %v1638 = vmul.f32 %v1635, %v1637
    %v1639 = vadd.f32 %v1635, %v1638
    %vm1640 = vweird.f32 %v1633
    %vm1641 = vweird.f32 %v1635
    %vm1642 = vmor %vm1640, %vm1641
    %v1643 = vsel %vm1642, %v1635, %v1639
    %v1644 = vand.u32 2147483647, %v1633
    %vm1645 = vcmp.eq.f32.partialorder %v1644, 8.507059e+37
    %v1646 = vand.u32 %v1633, 2147483648
    %v1647 = vor.u32 1.1754944e-38, %v1646
    %v1648 = vsel %vm1645, %v1647, %v1643
    %v1649 = vmul.f32 1.0, %v1648
    %v1650 = vrcp.pop %v1634
    %v1651 = vmul.f32 %v1634, %v1650
    %v1652 = vsub.f32 1.0, %v1651
    %v1653 = vmul.f32 %v1650, %v1652
    %v1654 = vadd.f32 %v1650, %v1653
    %vm1655 = vweird.f32 %v1634
    %vm1656 = vweird.f32 %v1650
    %vm1657 = vmor %vm1655, %vm1656
    %v1658 = vsel %vm1657, %v1650, %v1654
    %v1659 = vand.u32 2147483647, %v1634
    %vm1660 = vcmp.eq.f32.partialorder %v1659, 8.507059e+37
    %v1661 = vand.u32 %v1634, 2147483648
    %v1662 = vor.u32 1.1754944e-38, %v1661
    %v1663 = vsel %vm1660, %v1662, %v1658
    %v1664 = vmul.f32 1.0, %v1663
    %v1665 = vmul.f32 %v1623, %v1649
    %v1666 = vmul.f32 %v1625, %v1664
    %v1667 = vpack.c.bf16 %v1666, %v1665
    %v1700 = vunpack.c.l.b16 %v1375
    %v1701 = vunpack.c.h.b16 %v1375
    %v1702 = vunpack.c.l.b16 %v1376
    %v1703 = vunpack.c.h.b16 %v1376
    %v1704 = vunpack.c.l.b16 %v1377
    %v1705 = vunpack.c.h.b16 %v1377
    %v1706 = vunpack.c.l.b16 %v1378
    %v1707 = vunpack.c.h.b16 %v1378
    %v1708 = vunpack.c.l.b16 %v1379
    %v1709 = vunpack.c.h.b16 %v1379
    %v1710 = vunpack.c.l.b16 %v1380
    %v1711 = vunpack.c.h.b16 %v1380
    %v1712 = vunpack.c.l.b16 %v1381
    %v1713 = vunpack.c.h.b16 %v1381
    %v1714 = vunpack.c.l.b16 %v1382
    %v1715 = vunpack.c.h.b16 %v1382
    %v1716 = vunpack.c.l.b16 %v1383
    %v1717 = vunpack.c.h.b16 %v1383
    %v1718 = vunpack.c.l.b16 %v1384
    %v1719 = vunpack.c.h.b16 %v1384
    %v1720 = vunpack.c.l.b16 %v1385
    %v1721 = vunpack.c.h.b16 %v1385
    %v1722 = vunpack.c.l.b16 %v1386
    %v1723 = vunpack.c.h.b16 %v1386
    %v1724 = vunpack.c.l.b16 %v1387
    %v1725 = vunpack.c.h.b16 %v1387
    %v1726 = vunpack.c.l.b16 %v1388
    %v1727 = vunpack.c.h.b16 %v1388
    %v1728 = vunpack.c.l.b16 %v1389
    %v1729 = vunpack.c.h.b16 %v1389
    %v1730 = vunpack.c.l.b16 %v1390
    %v1731 = vunpack.c.h.b16 %v1390
    %v1732 = vunpack.c.l.b16 %v1391
    %v1733 = vunpack.c.h.b16 %v1391
    %v1734 = vunpack.c.l.b16 %v1392
    %v1735 = vunpack.c.h.b16 %v1392
    %v1736 = vunpack.c.l.b16 %v1393
    %v1737 = vunpack.c.h.b16 %v1393
    %v1738 = vunpack.c.l.b16 %v1394
    %v1739 = vunpack.c.h.b16 %v1394
    %v1740 = vunpack.c.l.b16 %v1395
    %v1741 = vunpack.c.h.b16 %v1395
    %v1742 = vunpack.c.l.b16 %v1396
    %v1743 = vunpack.c.h.b16 %v1396
    %v1744 = vunpack.c.l.b16 %v1397
    %v1745 = vunpack.c.h.b16 %v1397
    %v1746 = vunpack.c.l.b16 %v1398
    %v1747 = vunpack.c.h.b16 %v1398
    %v1748 = vunpack.c.l.b16 %v1399
    %v1749 = vunpack.c.h.b16 %v1399
    %v1750 = vunpack.c.l.b16 %v1400
    %v1751 = vunpack.c.h.b16 %v1400
    %v1752 = vunpack.c.l.b16 %v1401
    %v1753 = vunpack.c.h.b16 %v1401
    %v1754 = vunpack.c.l.b16 %v1402
    %v1755 = vunpack.c.h.b16 %v1402
    %v1756 = vunpack.c.l.b16 %v1403
    %v1757 = vunpack.c.h.b16 %v1403
    %v1758 = vunpack.c.l.b16 %v1404
    %v1759 = vunpack.c.h.b16 %v1404
    %v1760 = vunpack.c.l.b16 %v1405
    %v1761 = vunpack.c.h.b16 %v1405
    %v1762 = vunpack.c.l.b16 %v1406
    %v1763 = vunpack.c.h.b16 %v1406
    %v1764 = vpack.c.b16 %v1704, %v1700
    %v1765 = vpack.c.b16 %v1705, %v1701
    %v1766 = vpack.c.b16 %v1706, %v1702
    %v1767 = vpack.c.b16 %v1707, %v1703
    %v1768 = vpack.c.b16 %v1712, %v1708
    %v1769 = vpack.c.b16 %v1713, %v1709
    %v1770 = vpack.c.b16 %v1714, %v1710
    %v1771 = vpack.c.b16 %v1715, %v1711
    %v1772 = vpack.c.b16 %v1720, %v1716
    %v1773 = vpack.c.b16 %v1721, %v1717
    %v1774 = vpack.c.b16 %v1722, %v1718
    %v1775 = vpack.c.b16 %v1723, %v1719
    %v1776 = vpack.c.b16 %v1728, %v1724
    %v1777 = vpack.c.b16 %v1729, %v1725
    %v1778 = vpack.c.b16 %v1730, %v1726
    %v1779 = vpack.c.b16 %v1731, %v1727
    %v1780 = vpack.c.b16 %v1736, %v1732
    %v1781 = vpack.c.b16 %v1737, %v1733
    %v1782 = vpack.c.b16 %v1738, %v1734
    %v1783 = vpack.c.b16 %v1739, %v1735
    %v1784 = vpack.c.b16 %v1744, %v1740
    %v1785 = vpack.c.b16 %v1745, %v1741
    %v1786 = vpack.c.b16 %v1746, %v1742
    %v1787 = vpack.c.b16 %v1747, %v1743
    %v1788 = vpack.c.b16 %v1752, %v1748
    %v1789 = vpack.c.b16 %v1753, %v1749
    %v1790 = vpack.c.b16 %v1754, %v1750
    %v1791 = vpack.c.b16 %v1755, %v1751
    %v1792 = vpack.c.b16 %v1760, %v1756
    %v1793 = vpack.c.b16 %v1761, %v1757
    %v1794 = vpack.c.b16 %v1762, %v1758
    %v1795 = vpack.c.b16 %v1763, %v1759
    %1828 = vmatpush.bf16.msra.mxu0 %v1792
    %1829 = vmatpush.bf16.msra.mxu0 %v1788
    %1830 = vmatpush.bf16.msra.mxu0 %v1784
    %1831 = vmatpush.bf16.msra.mxu0 %v1780
    %1832 = vmatpush.bf16.msra.mxu0 %v1776
    %1833 = vmatpush.bf16.msra.mxu0 %v1772
    %1834 = vmatpush.bf16.msra.mxu0 %v1768
    %1835 = vmatpush.bf16.msra.mxu0 %v1764
    %1836 = vmatmul.bf16.gmra.mxu0 %v1667
    %v1837 = vpop.f32.mrf.mxu0
    %v1838 = vadd.f32 0.0, %v1837
    %v1839 = vpop.f32.mrf.mxu0
    %v1840 = vadd.f32 0.0, %v1839
    %1841 = vdwg.mxu0
    %1842 = vmatpush.bf16.msra.mxu0 %v1793
    %1843 = vmatpush.bf16.msra.mxu0 %v1789
    %1844 = vmatpush.bf16.msra.mxu0 %v1785
    %1845 = vmatpush.bf16.msra.mxu0 %v1781
    %1846 = vmatpush.bf16.msra.mxu0 %v1777
    %1847 = vmatpush.bf16.msra.mxu0 %v1773
    %1848 = vmatpush.bf16.msra.mxu0 %v1769
    %1849 = vmatpush.bf16.msra.mxu0 %v1765
    %1850 = vmatmul.bf16.gmra.mxu0 %v1667
    %v1851 = vpop.f32.mrf.mxu0
    %v1852 = vadd.f32 0.0, %v1851
    %v1853 = vpop.f32.mrf.mxu0
    %v1854 = vadd.f32 0.0, %v1853
    %1855 = vdwg.mxu0
    %1856 = vmatpush.bf16.msra.mxu0 %v1794
    %1857 = vmatpush.bf16.msra.mxu0 %v1790
    %1858 = vmatpush.bf16.msra.mxu0 %v1786
    %1859 = vmatpush.bf16.msra.mxu0 %v1782
    %1860 = vmatpush.bf16.msra.mxu0 %v1778
    %1861 = vmatpush.bf16.msra.mxu0 %v1774
    %1862 = vmatpush.bf16.msra.mxu0 %v1770
    %1863 = vmatpush.bf16.msra.mxu0 %v1766
    %1864 = vmatmul.bf16.gmra.mxu0 %v1667
    %v1865 = vpop.f32.mrf.mxu0
    %v1866 = vadd.f32 0.0, %v1865
    %v1867 = vpop.f32.mrf.mxu0
    %v1868 = vadd.f32 0.0, %v1867
    %1869 = vdwg.mxu0
    %1870 = vmatpush.bf16.msra.mxu0 %v1795
    %1871 = vmatpush.bf16.msra.mxu0 %v1791
    %1872 = vmatpush.bf16.msra.mxu0 %v1787
    %1873 = vmatpush.bf16.msra.mxu0 %v1783
    %1874 = vmatpush.bf16.msra.mxu0 %v1779
    %1875 = vmatpush.bf16.msra.mxu0 %v1775
    %1876 = vmatpush.bf16.msra.mxu0 %v1771
    %1877 = vmatpush.bf16.msra.mxu0 %v1767
    %1878 = vmatmul.bf16.gmra.mxu0 %v1667
    %v1879 = vpop.f32.mrf.mxu0
    %v1880 = vadd.f32 0.0, %v1879
    %v1881 = vpop.f32.mrf.mxu0
    %v1882 = vadd.f32 0.0, %v1881
    %1883 = vdwg.mxu0
    %v1884 = vmul.f32 %v517, %v1838
    %v1885 = vmul.f32 %v537, %v1852
    %v1886 = vmul.f32 %v557, %v1866
    %v1887 = vmul.f32 %v569, %v1880
    %v1888 = vmul.f32 %v522, %v1840
    %v1889 = vmul.f32 %v542, %v1854
    %v1890 = vmul.f32 %v562, %v1868
    %v1891 = vmul.f32 %v574, %v1882
    %v1892 = vadd.f32 %v1884, %v1885
    %v1893 = vadd.f32 %v1888, %v1889
    %v1894 = vadd.f32 %v1892, %v1886
    %v1895 = vadd.f32 %v1893, %v1890
    %v1896 = vadd.f32 %v1894, %v1887
    %v1897 = vadd.f32 %v1895, %v1891
    %v1898 = vmul.f32 %v1561, %v1896
    %v1899 = vmul.f32 %v1563, %v1897
    %v1900 = vpack.c.bf16 %v1899, %v1898
    %1901 = vmatpush.bf16.msra.mxu0 0
    %1902 = vmatpush.bf16.msra.mxu0 0
    %1903 = vmatpush.bf16.msra.mxu0 0
    %1904 = vmatpush.bf16.msra.mxu0 0
    %1905 = vmatpush.bf16.msra.mxu0 0
    %1906 = vmatpush.bf16.msra.mxu0 0
    %1907 = vmatpush.bf16.msra.mxu0 0
    %1908 = vmatpush.bf16.msra.mxu0 %v1900
    %1909 = vmatmul.bf16.gmra.mxu0 %v1216
    %v1910 = vpop.f32.mrf.mxu0
    %v1911 = vadd.f32 0.0, %v1910
    %v1912 = vpop.f32.mrf.mxu0
    %1913 = vdwg.mxu0
    %v1914 = vmul.f32 %v1911, 0.70710677
    %v1915 = vpack.c.bf16 %v1914, %v1914
    %v1932 = vunpack.c.l.b16 %v1408
    %v1933 = vunpack.c.l.b16 %v1409
    %v1934 = vunpack.c.l.b16 %v1410
    %v1935 = vunpack.c.l.b16 %v1411
    %v1936 = vunpack.c.l.b16 %v1412
    %v1937 = vunpack.c.l.b16 %v1413
    %v1938 = vunpack.c.l.b16 %v1414
    %v1939 = vunpack.c.l.b16 %v1415
    %v1940 = vunpack.c.l.b16 %v1416
    %v1941 = vunpack.c.l.b16 %v1417
    %v1942 = vunpack.c.l.b16 %v1418
    %v1943 = vunpack.c.l.b16 %v1419
    %v1944 = vunpack.c.l.b16 %v1420
    %v1945 = vunpack.c.l.b16 %v1421
    %v1946 = vunpack.c.l.b16 %v1422
    %v1947 = vunpack.c.l.b16 %v1423
    %v1948 = vpack.c.b16 %v1933, %v1932
    %v1949 = vpack.c.b16 %v1935, %v1934
    %v1950 = vpack.c.b16 %v1937, %v1936
    %v1951 = vpack.c.b16 %v1939, %v1938
    %v1952 = vpack.c.b16 %v1941, %v1940
    %v1953 = vpack.c.b16 %v1943, %v1942
    %v1954 = vpack.c.b16 %v1945, %v1944
    %v1955 = vpack.c.b16 %v1947, %v1946
    %1964 = vmatpush.bf16.msra.mxu0 %v1955
    %1965 = vmatpush.bf16.msra.mxu0 %v1954
    %1966 = vmatpush.bf16.msra.mxu0 %v1953
    %1967 = vmatpush.bf16.msra.mxu0 %v1952
    %1968 = vmatpush.bf16.msra.mxu0 %v1951
    %1969 = vmatpush.bf16.msra.mxu0 %v1950
    %1970 = vmatpush.bf16.msra.mxu0 %v1949
    %1971 = vmatpush.bf16.msra.mxu0 %v1948
    %1972 = vmatmul.bf16.gmra.mxu0 %v1915
    %v1973 = vpop.f32.mrf.mxu0
    %v1974 = vadd.f32 0.0, %v1973
    %v1975 = vpop.f32.mrf.mxu0
    %1976 = vdwg.mxu0
    %v1977 = vadd.f32 %v1485, %v1974
    %v1978 = vxor.u32 %v1977, 2147483648
    %v1979 = vmul.f32 %v1978, 1.442695
    %v1980 = vpow.pop %v1979
    %v1981 = vadd.f32 %v1980, 1.0
    %v1982 = vrcp.pop %v1981
    %v1983 = vmul.f32 %v1981, %v1982
    %v1984 = vsub.f32 1.0, %v1983
    %v1985 = vmul.f32 %v1982, %v1984
    %v1986 = vadd.f32 %v1982, %v1985
    %vm1987 = vweird.f32 %v1981
    %vm1988 = vweird.f32 %v1982
    %vm1989 = vmor %vm1987, %vm1988
    %v1990 = vsel %vm1989, %v1982, %v1986
    %v1991 = vand.u32 2147483647, %v1981
    %vm1992 = vcmp.eq.f32.partialorder %v1991, 8.507059e+37
    %v1993 = vand.u32 %v1981, 2147483648
    %v1994 = vor.u32 1.1754944e-38, %v1993
    %v1995 = vsel %vm1992, %v1994, %v1990
    %v1996 = vmul.f32 1.0, %v1995
    %1997 = vrot.lane.b32.xlu0 %v1977, 112
    %v1998 = vpop.permute.xlu0 %1997
    %v1999 = vmul.f32 %v1998, %v1996
    %v2000 = vmul.f32 %v1977, %v1996
    %v2001 = vsel %vm1319, %v1999, 0.0
    %v2002 = vsel %vm1317, %v2000, %v2001
    %v2003 = vpack.c.bf16 %v2002, %v2002
    %s2004 = scalar_lea.vmem [#allocation2], 128
    %v2005 = vld [vmem:[%s2004] sm:$0xf]
    %v2006 = vld [vmem:[%s2004 + $0x4] sm:$0xf]
    %v2007 = vld [vmem:[%s2004 + $0x8] sm:$0xf]
    %v2008 = vld [vmem:[%s2004 + $0xc] sm:$0xf]
    %v2009 = vld [vmem:[%s2004 + $0x10] sm:$0xf]
    %v2010 = vld [vmem:[%s2004 + $0x14] sm:$0xf]
    %v2011 = vld [vmem:[%s2004 + $0x18] sm:$0xf]
    %v2012 = vld [vmem:[%s2004 + $0x1c] sm:$0xf]
    %v2013 = vld [vmem:[%s2004 + $0x20] sm:$0xf]
    %v2014 = vld [vmem:[%s2004 + $0x24] sm:$0xf]
    %v2015 = vld [vmem:[%s2004 + $0x28] sm:$0xf]
    %v2016 = vld [vmem:[%s2004 + $0x2c] sm:$0xf]
    %v2017 = vld [vmem:[%s2004 + $0x30] sm:$0xf]
    %v2018 = vld [vmem:[%s2004 + $0x34] sm:$0xf]
    %v2019 = vld [vmem:[%s2004 + $0x38] sm:$0xf]
    %v2020 = vld [vmem:[%s2004 + $0x3c] sm:$0xf]
    %s2021 = scalar_lea.vmem [#allocation5], 128
    %v2022 = vld [vmem:[%s2021] sm:$0xf]
    %v2023 = vld [vmem:[%s2021 + $0x4] sm:$0xf]
    %v2024 = vld [vmem:[%s2021 + $0x8] sm:$0xf]
    %v2025 = vld [vmem:[%s2021 + $0xc] sm:$0xf]
    %v2026 = vld [vmem:[%s2021 + $0x10] sm:$0xf]
    %v2027 = vld [vmem:[%s2021 + $0x14] sm:$0xf]
    %v2028 = vld [vmem:[%s2021 + $0x18] sm:$0xf]
    %v2029 = vld [vmem:[%s2021 + $0x1c] sm:$0xf]
    %v2030 = vld [vmem:[%s2021 + $0x20] sm:$0xf]
    %v2031 = vld [vmem:[%s2021 + $0x24] sm:$0xf]
    %v2032 = vld [vmem:[%s2021 + $0x28] sm:$0xf]
    %v2033 = vld [vmem:[%s2021 + $0x2c] sm:$0xf]
    %v2034 = vld [vmem:[%s2021 + $0x30] sm:$0xf]
    %v2035 = vld [vmem:[%s2021 + $0x34] sm:$0xf]
    %v2036 = vld [vmem:[%s2021 + $0x38] sm:$0xf]
    %v2037 = vld [vmem:[%s2021 + $0x3c] sm:$0xf]
    %s2038 = scalar_lea.vmem [#allocation7], 128
    %v2039 = vld [vmem:[%s2038] sm:$0xf]
    %v2040 = vld [vmem:[%s2038 + $0x4] sm:$0xf]
    %v2041 = vld [vmem:[%s2038 + $0x8] sm:$0xf]
    %v2042 = vld [vmem:[%s2038 + $0xc] sm:$0xf]
    %v2043 = vld [vmem:[%s2038 + $0x10] sm:$0xf]
    %v2044 = vld [vmem:[%s2038 + $0x14] sm:$0xf]
    %v2045 = vld [vmem:[%s2038 + $0x18] sm:$0xf]
    %v2046 = vld [vmem:[%s2038 + $0x1c] sm:$0xf]
    %v2047 = vld [vmem:[%s2038 + $0x20] sm:$0xf]
    %v2048 = vld [vmem:[%s2038 + $0x24] sm:$0xf]
    %v2049 = vld [vmem:[%s2038 + $0x28] sm:$0xf]
    %v2050 = vld [vmem:[%s2038 + $0x2c] sm:$0xf]
    %v2051 = vld [vmem:[%s2038 + $0x30] sm:$0xf]
    %v2052 = vld [vmem:[%s2038 + $0x34] sm:$0xf]
    %v2053 = vld [vmem:[%s2038 + $0x38] sm:$0xf]
    %v2054 = vld [vmem:[%s2038 + $0x3c] sm:$0xf]
    %s2055 = scalar_lea.vmem [#allocation8], 512
    %v2056 = vld [vmem:[%s2055] sm:$0xff]
    %v2057 = vld [vmem:[%s2055 + $0x8] sm:$0xff]
    %v2058 = vld [vmem:[%s2055 + $0x10] sm:$0xff]
    %v2059 = vld [vmem:[%s2055 + $0x18] sm:$0xff]
    %v2060 = vld [vmem:[%s2055 + $0x20] sm:$0xff]
    %v2061 = vld [vmem:[%s2055 + $0x28] sm:$0xff]
    %v2062 = vld [vmem:[%s2055 + $0x30] sm:$0xff]
    %v2063 = vld [vmem:[%s2055 + $0x38] sm:$0xff]
    %v2064 = vld [vmem:[%s2055 + $0x40] sm:$0xff]
    %v2065 = vld [vmem:[%s2055 + $0x48] sm:$0xff]
    %v2066 = vld [vmem:[%s2055 + $0x50] sm:$0xff]
    %v2067 = vld [vmem:[%s2055 + $0x58] sm:$0xff]
    %v2068 = vld [vmem:[%s2055 + $0x60] sm:$0xff]
    %v2069 = vld [vmem:[%s2055 + $0x68] sm:$0xff]
    %v2070 = vld [vmem:[%s2055 + $0x70] sm:$0xff]
    %v2071 = vld [vmem:[%s2055 + $0x78] sm:$0xff]
    %v2072 = vld [vmem:[%s2055 + $0x80] sm:$0xff]
    %v2073 = vld [vmem:[%s2055 + $0x88] sm:$0xff]
    %v2074 = vld [vmem:[%s2055 + $0x90] sm:$0xff]
    %v2075 = vld [vmem:[%s2055 + $0x98] sm:$0xff]
    %v2076 = vld [vmem:[%s2055 + $0xa0] sm:$0xff]
    %v2077 = vld [vmem:[%s2055 + $0xa8] sm:$0xff]
    %v2078 = vld [vmem:[%s2055 + $0xb0] sm:$0xff]
    %v2079 = vld [vmem:[%s2055 + $0xb8] sm:$0xff]
    %v2080 = vld [vmem:[%s2055 + $0xc0] sm:$0xff]
    %v2081 = vld [vmem:[%s2055 + $0xc8] sm:$0xff]
    %v2082 = vld [vmem:[%s2055 + $0xd0] sm:$0xff]
    %v2083 = vld [vmem:[%s2055 + $0xd8] sm:$0xff]
    %v2084 = vld [vmem:[%s2055 + $0xe0] sm:$0xff]
    %v2085 = vld [vmem:[%s2055 + $0xe8] sm:$0xff]
    %v2086 = vld [vmem:[%s2055 + $0xf0] sm:$0xff]
    %v2087 = vld [vmem:[%s2055 + $0xf8] sm:$0xff]
    %s2088 = scalar_lea.vmem [#allocation10], 128
    %v2089 = vld [vmem:[%s2088] sm:$0xf]
    %v2090 = vld [vmem:[%s2088 + $0x4] sm:$0xf]
    %v2091 = vld [vmem:[%s2088 + $0x8] sm:$0xf]
    %v2092 = vld [vmem:[%s2088 + $0xc] sm:$0xf]
    %v2093 = vld [vmem:[%s2088 + $0x10] sm:$0xf]
    %v2094 = vld [vmem:[%s2088 + $0x14] sm:$0xf]
    %v2095 = vld [vmem:[%s2088 + $0x18] sm:$0xf]
    %v2096 = vld [vmem:[%s2088 + $0x1c] sm:$0xf]
    %v2097 = vld [vmem:[%s2088 + $0x20] sm:$0xf]
    %v2098 = vld [vmem:[%s2088 + $0x24] sm:$0xf]
    %v2099 = vld [vmem:[%s2088 + $0x28] sm:$0xf]
    %v2100 = vld [vmem:[%s2088 + $0x2c] sm:$0xf]
    %v2101 = vld [vmem:[%s2088 + $0x30] sm:$0xf]
    %v2102 = vld [vmem:[%s2088 + $0x34] sm:$0xf]
    %v2103 = vld [vmem:[%s2088 + $0x38] sm:$0xf]
    %v2104 = vld [vmem:[%s2088 + $0x3c] sm:$0xf]
    %v2121 = vunpack.c.l.b16 %v2005
    %v2122 = vunpack.c.l.b16 %v2006
    %v2123 = vunpack.c.l.b16 %v2007
    %v2124 = vunpack.c.l.b16 %v2008
    %v2125 = vunpack.c.l.b16 %v2009
    %v2126 = vunpack.c.l.b16 %v2010
    %v2127 = vunpack.c.l.b16 %v2011
    %v2128 = vunpack.c.l.b16 %v2012
    %v2129 = vunpack.c.l.b16 %v2013
    %v2130 = vunpack.c.l.b16 %v2014
    %v2131 = vunpack.c.l.b16 %v2015
    %v2132 = vunpack.c.l.b16 %v2016
    %v2133 = vunpack.c.l.b16 %v2017
    %v2134 = vunpack.c.l.b16 %v2018
    %v2135 = vunpack.c.l.b16 %v2019
    %v2136 = vunpack.c.l.b16 %v2020
    %v2137 = vpack.c.b16 %v2122, %v2121
    %v2138 = vpack.c.b16 %v2124, %v2123
    %v2139 = vpack.c.b16 %v2126, %v2125
    %v2140 = vpack.c.b16 %v2128, %v2127
    %v2141 = vpack.c.b16 %v2130, %v2129
    %v2142 = vpack.c.b16 %v2132, %v2131
    %v2143 = vpack.c.b16 %v2134, %v2133
    %v2144 = vpack.c.b16 %v2136, %v2135
    %2153 = vmatpush.bf16.msra.mxu0 %v2144
    %2154 = vmatpush.bf16.msra.mxu0 %v2143
    %2155 = vmatpush.bf16.msra.mxu0 %v2142
    %2156 = vmatpush.bf16.msra.mxu0 %v2141
    %2157 = vmatpush.bf16.msra.mxu0 %v2140
    %2158 = vmatpush.bf16.msra.mxu0 %v2139
    %2159 = vmatpush.bf16.msra.mxu0 %v2138
    %2160 = vmatpush.bf16.msra.mxu0 %v2137
    %2161 = vmatmul.bf16.gmra.mxu0 %v2003
    %v2162 = vpop.f32.mrf.mxu0
    %v2163 = vadd.f32 0.0, %v2162
    %v2164 = vpop.f32.mrf.mxu0
    %2165 = vdwg.mxu0
    %v2166 = vmul.f32 %v2163, %v632
    %v2183 = vunpack.c.l.b16 %v2022
    %v2184 = vunpack.c.l.b16 %v2023
    %v2185 = vunpack.c.l.b16 %v2024
    %v2186 = vunpack.c.l.b16 %v2025
    %v2187 = vunpack.c.l.b16 %v2026
    %v2188 = vunpack.c.l.b16 %v2027
    %v2189 = vunpack.c.l.b16 %v2028
    %v2190 = vunpack.c.l.b16 %v2029
    %v2191 = vunpack.c.l.b16 %v2030
    %v2192 = vunpack.c.l.b16 %v2031
    %v2193 = vunpack.c.l.b16 %v2032
    %v2194 = vunpack.c.l.b16 %v2033
    %v2195 = vunpack.c.l.b16 %v2034
    %v2196 = vunpack.c.l.b16 %v2035
    %v2197 = vunpack.c.l.b16 %v2036
    %v2198 = vunpack.c.l.b16 %v2037
    %v2199 = vpack.c.b16 %v2184, %v2183
    %v2200 = vpack.c.b16 %v2186, %v2185
    %v2201 = vpack.c.b16 %v2188, %v2187
    %v2202 = vpack.c.b16 %v2190, %v2189
    %v2203 = vpack.c.b16 %v2192, %v2191
    %v2204 = vpack.c.b16 %v2194, %v2193
    %v2205 = vpack.c.b16 %v2196, %v2195
    %v2206 = vpack.c.b16 %v2198, %v2197
    %2215 = vmatpush.bf16.msra.mxu0 %v2206
    %2216 = vmatpush.bf16.msra.mxu0 %v2205
    %2217 = vmatpush.bf16.msra.mxu0 %v2204
    %2218 = vmatpush.bf16.msra.mxu0 %v2203
    %2219 = vmatpush.bf16.msra.mxu0 %v2202
    %2220 = vmatpush.bf16.msra.mxu0 %v2201
    %2221 = vmatpush.bf16.msra.mxu0 %v2200
    %2222 = vmatpush.bf16.msra.mxu0 %v2199
    %2223 = vmatmul.bf16.gmra.mxu0 %v2003
    %v2224 = vpop.f32.mrf.mxu0
    %v2225 = vadd.f32 0.0, %v2224
    %v2226 = vpop.f32.mrf.mxu0
    %2227 = vdwg.mxu0
    %v2228 = vpack.c.bf16 %v2225, %v2225
    %v2230 = vsel %vm860, %v2228, 0
    %2232 = vmatpush.bf16.msra.mxu0 0
    %2233 = vmatpush.bf16.msra.mxu0 0
    %2234 = vmatpush.bf16.msra.mxu0 0
    %2235 = vmatpush.bf16.msra.mxu0 0
    %2236 = vmatpush.bf16.msra.mxu0 0
    %2237 = vmatpush.bf16.msra.mxu0 0
    %2238 = vmatpush.bf16.msra.mxu0 0
    %2239 = vmatpush.bf16.msra.mxu0 %v2230
    %2240 = vmatmul.bf16.gmra.mxu0 %v858
    %v2241 = vpop.f32.mrf.mxu0
    %v2242 = vadd.f32 0.0, %v2241
    %v2243 = vpop.f32.mrf.mxu0
    %v2244 = vadd.f32 0.0, %v2243
    %2245 = vdwg.mxu0
    %v2262 = vunpack.c.l.b16 %v2039
    %v2263 = vunpack.c.l.b16 %v2040
    %v2264 = vunpack.c.l.b16 %v2041
    %v2265 = vunpack.c.l.b16 %v2042
    %v2266 = vunpack.c.l.b16 %v2043
    %v2267 = vunpack.c.l.b16 %v2044
    %v2268 = vunpack.c.l.b16 %v2045
    %v2269 = vunpack.c.l.b16 %v2046
    %v2270 = vunpack.c.l.b16 %v2047
    %v2271 = vunpack.c.l.b16 %v2048
    %v2272 = vunpack.c.l.b16 %v2049
    %v2273 = vunpack.c.l.b16 %v2050
    %v2274 = vunpack.c.l.b16 %v2051
    %v2275 = vunpack.c.l.b16 %v2052
    %v2276 = vunpack.c.l.b16 %v2053
    %v2277 = vunpack.c.l.b16 %v2054
    %v2278 = vpack.c.b16 %v2263, %v2262
    %v2279 = vpack.c.b16 %v2265, %v2264
    %v2280 = vpack.c.b16 %v2267, %v2266
    %v2281 = vpack.c.b16 %v2269, %v2268
    %v2282 = vpack.c.b16 %v2271, %v2270
    %v2283 = vpack.c.b16 %v2273, %v2272
    %v2284 = vpack.c.b16 %v2275, %v2274
    %v2285 = vpack.c.b16 %v2277, %v2276
    %2294 = vmatpush.bf16.msra.mxu0 %v2285
    %2295 = vmatpush.bf16.msra.mxu0 %v2284
    %2296 = vmatpush.bf16.msra.mxu0 %v2283
    %2297 = vmatpush.bf16.msra.mxu0 %v2282
    %2298 = vmatpush.bf16.msra.mxu0 %v2281
    %2299 = vmatpush.bf16.msra.mxu0 %v2280
    %2300 = vmatpush.bf16.msra.mxu0 %v2279
    %2301 = vmatpush.bf16.msra.mxu0 %v2278
    %2302 = vmatmul.bf16.gmra.mxu0 %v604
    %v2303 = vpop.f32.mrf.mxu0
    %v2304 = vadd.f32 0.0, %v2303
    %v2305 = vpop.f32.mrf.mxu0
    %v2306 = vadd.f32 0.0, %v2305
    %2307 = vdwg.mxu0
    %v2308 = vxor.u32 %v2304, 2147483648
    %v2309 = vxor.u32 %v2306, 2147483648
    %v2310 = vmul.f32 %v2308, 1.442695
    %v2311 = vpow.pop %v2310
    %v2312 = vmul.f32 %v2309, 1.442695
    %v2313 = vpow.pop %v2312
    %v2314 = vadd.f32 %v2311, 1.0
    %v2315 = vadd.f32 %v2313, 1.0
    %v2316 = vrcp.pop %v2314
    %v2317 = vmul.f32 %v2314, %v2316
    %v2318 = vsub.f32 1.0, %v2317
    %v2319 = vmul.f32 %v2316, %v2318
    %v2320 = vadd.f32 %v2316, %v2319
    %vm2321 = vweird.f32 %v2314
    %vm2322 = vweird.f32 %v2316
    %vm2323 = vmor %vm2321, %vm2322
    %v2324 = vsel %vm2323, %v2316, %v2320
    %v2325 = vand.u32 2147483647, %v2314
    %vm2326 = vcmp.eq.f32.partialorder %v2325, 8.507059e+37
    %v2327 = vand.u32 %v2314, 2147483648
    %v2328 = vor.u32 1.1754944e-38, %v2327
    %v2329 = vsel %vm2326, %v2328, %v2324
    %v2330 = vmul.f32 1.0, %v2329
    %v2331 = vrcp.pop %v2315
    %v2332 = vmul.f32 %v2315, %v2331
    %v2333 = vsub.f32 1.0, %v2332
    %v2334 = vmul.f32 %v2331, %v2333
    %v2335 = vadd.f32 %v2331, %v2334
    %vm2336 = vweird.f32 %v2315
    %vm2337 = vweird.f32 %v2331
    %vm2338 = vmor %vm2336, %vm2337
    %v2339 = vsel %vm2338, %v2331, %v2335
    %v2340 = vand.u32 2147483647, %v2315
    %vm2341 = vcmp.eq.f32.partialorder %v2340, 8.507059e+37
    %v2342 = vand.u32 %v2315, 2147483648
    %v2343 = vor.u32 1.1754944e-38, %v2342
    %v2344 = vsel %vm2341, %v2343, %v2339
    %v2345 = vmul.f32 1.0, %v2344
    %v2346 = vmul.f32 %v2304, %v2330
    %v2347 = vmul.f32 %v2306, %v2345
    %v2348 = vpack.c.bf16 %v2347, %v2346
    %v2381 = vunpack.c.l.b16 %v2056
    %v2382 = vunpack.c.h.b16 %v2056
    %v2383 = vunpack.c.l.b16 %v2057
    %v2384 = vunpack.c.h.b16 %v2057
    %v2385 = vunpack.c.l.b16 %v2058
    %v2386 = vunpack.c.h.b16 %v2058
    %v2387 = vunpack.c.l.b16 %v2059
    %v2388 = vunpack.c.h.b16 %v2059
    %v2389 = vunpack.c.l.b16 %v2060
    %v2390 = vunpack.c.h.b16 %v2060
    %v2391 = vunpack.c.l.b16 %v2061
    %v2392 = vunpack.c.h.b16 %v2061
    %v2393 = vunpack.c.l.b16 %v2062
    %v2394 = vunpack.c.h.b16 %v2062
    %v2395 = vunpack.c.l.b16 %v2063
    %v2396 = vunpack.c.h.b16 %v2063
    %v2397 = vunpack.c.l.b16 %v2064
    %v2398 = vunpack.c.h.b16 %v2064
    %v2399 = vunpack.c.l.b16 %v2065
    %v2400 = vunpack.c.h.b16 %v2065
    %v2401 = vunpack.c.l.b16 %v2066
    %v2402 = vunpack.c.h.b16 %v2066
    %v2403 = vunpack.c.l.b16 %v2067
    %v2404 = vunpack.c.h.b16 %v2067
    %v2405 = vunpack.c.l.b16 %v2068
    %v2406 = vunpack.c.h.b16 %v2068
    %v2407 = vunpack.c.l.b16 %v2069
    %v2408 = vunpack.c.h.b16 %v2069
    %v2409 = vunpack.c.l.b16 %v2070
    %v2410 = vunpack.c.h.b16 %v2070
    %v2411 = vunpack.c.l.b16 %v2071
    %v2412 = vunpack.c.h.b16 %v2071
    %v2413 = vunpack.c.l.b16 %v2072
    %v2414 = vunpack.c.h.b16 %v2072
    %v2415 = vunpack.c.l.b16 %v2073
    %v2416 = vunpack.c.h.b16 %v2073
    %v2417 = vunpack.c.l.b16 %v2074
    %v2418 = vunpack.c.h.b16 %v2074
    %v2419 = vunpack.c.l.b16 %v2075
    %v2420 = vunpack.c.h.b16 %v2075
    %v2421 = vunpack.c.l.b16 %v2076
    %v2422 = vunpack.c.h.b16 %v2076
    %v2423 = vunpack.c.l.b16 %v2077
    %v2424 = vunpack.c.h.b16 %v2077
    %v2425 = vunpack.c.l.b16 %v2078
    %v2426 = vunpack.c.h.b16 %v2078
    %v2427 = vunpack.c.l.b16 %v2079
    %v2428 = vunpack.c.h.b16 %v2079
    %v2429 = vunpack.c.l.b16 %v2080
    %v2430 = vunpack.c.h.b16 %v2080
    %v2431 = vunpack.c.l.b16 %v2081
    %v2432 = vunpack.c.h.b16 %v2081
    %v2433 = vunpack.c.l.b16 %v2082
    %v2434 = vunpack.c.h.b16 %v2082
    %v2435 = vunpack.c.l.b16 %v2083
    %v2436 = vunpack.c.h.b16 %v2083
    %v2437 = vunpack.c.l.b16 %v2084
    %v2438 = vunpack.c.h.b16 %v2084
    %v2439 = vunpack.c.l.b16 %v2085
    %v2440 = vunpack.c.h.b16 %v2085
    %v2441 = vunpack.c.l.b16 %v2086
    %v2442 = vunpack.c.h.b16 %v2086
    %v2443 = vunpack.c.l.b16 %v2087
    %v2444 = vunpack.c.h.b16 %v2087
    %v2445 = vpack.c.b16 %v2385, %v2381
    %v2446 = vpack.c.b16 %v2386, %v2382
    %v2447 = vpack.c.b16 %v2387, %v2383
    %v2448 = vpack.c.b16 %v2388, %v2384
    %v2449 = vpack.c.b16 %v2393, %v2389
    %v2450 = vpack.c.b16 %v2394, %v2390
    %v2451 = vpack.c.b16 %v2395, %v2391
    %v2452 = vpack.c.b16 %v2396, %v2392
    %v2453 = vpack.c.b16 %v2401, %v2397
    %v2454 = vpack.c.b16 %v2402, %v2398
    %v2455 = vpack.c.b16 %v2403, %v2399
    %v2456 = vpack.c.b16 %v2404, %v2400
    %v2457 = vpack.c.b16 %v2409, %v2405
    %v2458 = vpack.c.b16 %v2410, %v2406
    %v2459 = vpack.c.b16 %v2411, %v2407
    %v2460 = vpack.c.b16 %v2412, %v2408
    %v2461 = vpack.c.b16 %v2417, %v2413
    %v2462 = vpack.c.b16 %v2418, %v2414
    %v2463 = vpack.c.b16 %v2419, %v2415
    %v2464 = vpack.c.b16 %v2420, %v2416
    %v2465 = vpack.c.b16 %v2425, %v2421
    %v2466 = vpack.c.b16 %v2426, %v2422
    %v2467 = vpack.c.b16 %v2427, %v2423
    %v2468 = vpack.c.b16 %v2428, %v2424
    %v2469 = vpack.c.b16 %v2433, %v2429
    %v2470 = vpack.c.b16 %v2434, %v2430
    %v2471 = vpack.c.b16 %v2435, %v2431
    %v2472 = vpack.c.b16 %v2436, %v2432
    %v2473 = vpack.c.b16 %v2441, %v2437
    %v2474 = vpack.c.b16 %v2442, %v2438
    %v2475 = vpack.c.b16 %v2443, %v2439
    %v2476 = vpack.c.b16 %v2444, %v2440
    %2509 = vmatpush.bf16.msra.mxu0 %v2473
    %2510 = vmatpush.bf16.msra.mxu0 %v2469
    %2511 = vmatpush.bf16.msra.mxu0 %v2465
    %2512 = vmatpush.bf16.msra.mxu0 %v2461
    %2513 = vmatpush.bf16.msra.mxu0 %v2457
    %2514 = vmatpush.bf16.msra.mxu0 %v2453
    %2515 = vmatpush.bf16.msra.mxu0 %v2449
    %2516 = vmatpush.bf16.msra.mxu0 %v2445
    %2517 = vmatmul.bf16.gmra.mxu0 %v2348
    %v2518 = vpop.f32.mrf.mxu0
    %v2519 = vadd.f32 0.0, %v2518
    %v2520 = vpop.f32.mrf.mxu0
    %v2521 = vadd.f32 0.0, %v2520
    %2522 = vdwg.mxu0
    %2523 = vmatpush.bf16.msra.mxu0 %v2474
    %2524 = vmatpush.bf16.msra.mxu0 %v2470
    %2525 = vmatpush.bf16.msra.mxu0 %v2466
    %2526 = vmatpush.bf16.msra.mxu0 %v2462
    %2527 = vmatpush.bf16.msra.mxu0 %v2458
    %2528 = vmatpush.bf16.msra.mxu0 %v2454
    %2529 = vmatpush.bf16.msra.mxu0 %v2450
    %2530 = vmatpush.bf16.msra.mxu0 %v2446
    %2531 = vmatmul.bf16.gmra.mxu0 %v2348
    %v2532 = vpop.f32.mrf.mxu0
    %v2533 = vadd.f32 0.0, %v2532
    %v2534 = vpop.f32.mrf.mxu0
    %v2535 = vadd.f32 0.0, %v2534
    %2536 = vdwg.mxu0
    %2537 = vmatpush.bf16.msra.mxu0 %v2475
    %2538 = vmatpush.bf16.msra.mxu0 %v2471
    %2539 = vmatpush.bf16.msra.mxu0 %v2467
    %2540 = vmatpush.bf16.msra.mxu0 %v2463
    %2541 = vmatpush.bf16.msra.mxu0 %v2459
    %2542 = vmatpush.bf16.msra.mxu0 %v2455
    %2543 = vmatpush.bf16.msra.mxu0 %v2451
    %2544 = vmatpush.bf16.msra.mxu0 %v2447
    %2545 = vmatmul.bf16.gmra.mxu0 %v2348
    %v2546 = vpop.f32.mrf.mxu0
    %v2547 = vadd.f32 0.0, %v2546
    %v2548 = vpop.f32.mrf.mxu0
    %v2549 = vadd.f32 0.0, %v2548
    %2550 = vdwg.mxu0
    %2551 = vmatpush.bf16.msra.mxu0 %v2476
    %2552 = vmatpush.bf16.msra.mxu0 %v2472
    %2553 = vmatpush.bf16.msra.mxu0 %v2468
    %2554 = vmatpush.bf16.msra.mxu0 %v2464
    %2555 = vmatpush.bf16.msra.mxu0 %v2460
    %2556 = vmatpush.bf16.msra.mxu0 %v2456
    %2557 = vmatpush.bf16.msra.mxu0 %v2452
    %2558 = vmatpush.bf16.msra.mxu0 %v2448
    %2559 = vmatmul.bf16.gmra.mxu0 %v2348
    %v2560 = vpop.f32.mrf.mxu0
    %v2561 = vadd.f32 0.0, %v2560
    %v2562 = vpop.f32.mrf.mxu0
    %v2563 = vadd.f32 0.0, %v2562
    %2564 = vdwg.mxu0
    %v2565 = vmul.f32 %v517, %v2519
    %v2566 = vmul.f32 %v537, %v2533
    %v2567 = vmul.f32 %v557, %v2547
    %v2568 = vmul.f32 %v569, %v2561
    %v2569 = vmul.f32 %v522, %v2521
    %v2570 = vmul.f32 %v542, %v2535
    %v2571 = vmul.f32 %v562, %v2549
    %v2572 = vmul.f32 %v574, %v2563
    %v2573 = vadd.f32 %v2565, %v2566
    %v2574 = vadd.f32 %v2569, %v2570
    %v2575 = vadd.f32 %v2573, %v2567
    %v2576 = vadd.f32 %v2574, %v2571
    %v2577 = vadd.f32 %v2575, %v2568
    %v2578 = vadd.f32 %v2576, %v2572
    %v2579 = vmul.f32 %v2242, %v2577
    %v2580 = vmul.f32 %v2244, %v2578
    %v2581 = vpack.c.bf16 %v2580, %v2579
    %2582 = vmatpush.bf16.msra.mxu0 0
    %2583 = vmatpush.bf16.msra.mxu0 0
    %2584 = vmatpush.bf16.msra.mxu0 0
    %2585 = vmatpush.bf16.msra.mxu0 0
    %2586 = vmatpush.bf16.msra.mxu0 0
    %2587 = vmatpush.bf16.msra.mxu0 0
    %2588 = vmatpush.bf16.msra.mxu0 0
    %2589 = vmatpush.bf16.msra.mxu0 %v2581
    %2590 = vmatmul.bf16.gmra.mxu0 %v1216
    %v2591 = vpop.f32.mrf.mxu0
    %v2592 = vadd.f32 0.0, %v2591
    %v2593 = vpop.f32.mrf.mxu0
    %2594 = vdwg.mxu0
    %v2595 = vmul.f32 %v2592, 0.70710677
    %v2596 = vpack.c.bf16 %v2595, %v2595
    %v2613 = vunpack.c.l.b16 %v2089
    %v2614 = vunpack.c.l.b16 %v2090
    %v2615 = vunpack.c.l.b16 %v2091
    %v2616 = vunpack.c.l.b16 %v2092
    %v2617 = vunpack.c.l.b16 %v2093
    %v2618 = vunpack.c.l.b16 %v2094
    %v2619 = vunpack.c.l.b16 %v2095
    %v2620 = vunpack.c.l.b16 %v2096
    %v2621 = vunpack.c.l.b16 %v2097
    %v2622 = vunpack.c.l.b16 %v2098
    %v2623 = vunpack.c.l.b16 %v2099
    %v2624 = vunpack.c.l.b16 %v2100
    %v2625 = vunpack.c.l.b16 %v2101
    %v2626 = vunpack.c.l.b16 %v2102
    %v2627 = vunpack.c.l.b16 %v2103
    %v2628 = vunpack.c.l.b16 %v2104
    %v2629 = vpack.c.b16 %v2614, %v2613
    %v2630 = vpack.c.b16 %v2616, %v2615
    %v2631 = vpack.c.b16 %v2618, %v2617
    %v2632 = vpack.c.b16 %v2620, %v2619
    %v2633 = vpack.c.b16 %v2622, %v2621
    %v2634 = vpack.c.b16 %v2624, %v2623
    %v2635 = vpack.c.b16 %v2626, %v2625
    %v2636 = vpack.c.b16 %v2628, %v2627
    %2645 = vmatpush.bf16.msra.mxu0 %v2636
    %2646 = vmatpush.bf16.msra.mxu0 %v2635
    %2647 = vmatpush.bf16.msra.mxu0 %v2634
    %2648 = vmatpush.bf16.msra.mxu0 %v2633
    %2649 = vmatpush.bf16.msra.mxu0 %v2632
    %2650 = vmatpush.bf16.msra.mxu0 %v2631
    %2651 = vmatpush.bf16.msra.mxu0 %v2630
    %2652 = vmatpush.bf16.msra.mxu0 %v2629
    %2653 = vmatmul.bf16.gmra.mxu0 %v2596
    %v2654 = vpop.f32.mrf.mxu0
    %v2655 = vadd.f32 0.0, %v2654
    %v2656 = vpop.f32.mrf.mxu0
    %2657 = vdwg.mxu0
    %v2658 = vadd.f32 %v2166, %v2655
    %v2659 = vld [vmem:[%s5] sm:$0xff]
    %v2661 = vsel %vm856, %v2659, 0
    %2663 = vmatpush.msra.mxu0 0.0
    %2664 = vmatpush.msra.mxu0 0.0
    %2665 = vmatpush.msra.mxu0 0.0
    %2666 = vmatpush.msra.mxu0 0.0
    %2667 = vmatpush.msra.mxu0 0.0
    %2668 = vmatpush.msra.mxu0 0.0
    %2669 = vmatpush.msra.mxu0 0.0
    %2670 = vmatpush.msra.mxu0 0.0
    %2671 = vmatpush.msra.mxu0 0.0
    %2672 = vmatpush.msra.mxu0 0.0
    %2673 = vmatpush.msra.mxu0 0.0
    %2674 = vmatpush.msra.mxu0 0.0
    %2675 = vmatpush.msra.mxu0 0.0
    %2676 = vmatpush.msra.mxu0 0.0
    %2677 = vmatpush.msra.mxu0 0.0
    %2678 = vmatpush.msra.mxu0 %v2658
    %2679 = vmatmul.f32.gmra.mxu0 %v2661
    %v2680 = vpop.f32.mrf.mxu0
    %v2681 = vadd.f32 0.0, %v2680
    %2682 = vdwg.mxu0
    %2683 = vst [vmem:[#allocation11] sm:$0xff] %v2681
    // Predicated region
    $region66: #{tpu_custom_call.1} parent=1 // pred_check
      _
    $region67: #{tpu_custom_call.1} parent=1 // pred_check_branch
      %2685 = sbr.rel (0) target = $region69
    $region68: #{tpu_custom_call.1} parent=1 // pred_region
      %2687 = vsyncadd [#allocation4], 0
      %s2689 = sshll.u32 [#allocation11], 4
      %s2690 = int_to_ptr.vmem [resolvable:$true] %s2689
      %s2691 = sshll.u32 %s11, 4
      %s2692 = int_to_ptr.hbm [resolvable:$true] %s2691
      %2694 = dma.vmem_to_hbm [thread:$0]  %s2690, 128, %s2692, [#allocation4]
    $region69: #{tpu_custom_call.1} parent=1 // pred_fallthru
      _
    // Predicated region
    $region70: #{tpu_custom_call.1} parent=1 // pred_check
      _
    $region71: #{tpu_custom_call.1} parent=1 // pred_check_branch
      %2696 = sbr.rel (0) target = $region73
    $region72: #{tpu_custom_call.1} parent=1 // pred_region
      %2698 = dma.done [#allocation4], 128
    $region73: #{tpu_custom_call.1} parent=1 // pred_fallthru
      _
    %2699 = vsyncpa [#allocation3], 1
    %2700 = vsyncpa [#allocation6], 1
    %2701 = vsyncpa [#allocation9], 1
    %2702 = vsyncpa [#allocation4], 1

</llo_original>
